<compile_context>
chip_gen: v5e
topology: v5e:2x2
jax: 0.10.0
libtpu: 0.0.40
codegen_flags: <defaults>
</compile_context>

<pallas_src>
import functools
import math

import jax
import jax.numpy as jnp
from jax import lax
from jax.experimental import pallas as pl
from jax.experimental.pallas import tpu as pltpu


def _padded_dim(c):
    # Lane-dense padded embed dim (multiple of 128).  v5e's 4x128x128 MXU is
    # saturated by 128-multiples; for realistic C (>= 256) on v6e/v7x rounding
    # to 256-multiples keeps the 2x256x256 systolic array fully utilized.
    return ((c + 127) // 128) * 128


def _sdm_kernel(x_ref, wqkv_ref, o_ref, *scratch, c, cp):
    # x_ref:    (1, N, C)  bf16 — current batch element, unpadded channels.
    # wqkv_ref: (Cp, 3*Cp) bf16 — fused [Q|K|V] weights, pre-transposed,
    #           zero-padded, with 1/sqrt(N) folded into the Q columns.
    # o_ref:    (1, N, C)  f32.
    if cp == c:
        x = x_ref[0]                                    # already lane-dense
    else:
        # Zero-pad the channel (lane) axis to Cp inside VMEM.  Re-zeroed every
        # grid step so it stays correct when the batch axis is sharded across
        # TensorCores (per-core scratch on v7x megacore).
        xp_ref, = scratch
        xp_ref[...] = jnp.zeros_like(xp_ref)
        xp_ref[:, :c] = x_ref[0]
        x = xp_ref[...]                                 # (N, Cp) bf16

    wqkv = wqkv_ref[...]                                # (Cp, 3*Cp) bf16

    # Fused Q/K/V projection: one MXU matmul, bf16 operands, f32 accumulation.
    qkv = jnp.dot(x, wqkv, preferred_element_type=jnp.float32)   # (N, 3*Cp) f32
    q = qkv[:, :cp].astype(jnp.bfloat16)       # 1/sqrt(N) already folded in
    k = qkv[:, cp:2 * cp].astype(jnp.bfloat16)
    v = qkv[:, 2 * cp:].astype(jnp.bfloat16)

    # Scores: contract on the (padded) channel axis — padded lanes contribute 0,
    # and no (N, C) -> (C, N) transpose is materialized.
    s = lax.dot_general(q, k, (((1,), (1,)), ((), ())),
                        preferred_element_type=jnp.float32)      # (N, N) f32

    # Numerically stable softmax statistics, all in f32 on the VPU/EUP.
    m = jnp.max(s, axis=-1, keepdims=True)
    e = jnp.exp(s - m)
    denom = jnp.sum(e, axis=-1, keepdims=True)
    r = pl.reciprocal(denom, approx=True)               # EUP vrcp (free-ish slot)
    r = r * (2.0 - denom * r)                           # Newton step -> ~f32 exact

    # Deferred normalization: (e @ V) scaled by 1/denom afterwards (exact by
    # linearity); the broadcast multiply is only (N, C), not (N, N).
    out = jnp.dot(e.astype(jnp.bfloat16), v, preferred_element_type=jnp.float32)
    o_ref[0] = (out[:, :c] * r).astype(o_ref.dtype)


def prepare_sdm_weights(wq, wk, wv, n):
    """One-time fused-weight construction (hoisted out of the per-call path).

    wq/wk/wv: (C, C) nn.Linear weights (out, in).  Returns (Cp, 3*Cp) bf16 with
    the layers pre-transposed (y = x @ W.T), zero-padded to lane-dense Cp, and
    the PyTorch 1/sqrt(K.shape[-1]) = 1/sqrt(H*W) score scale folded into Q.
    """
    c = wq.shape[0]
    cp = _padded_dim(c)
    scale = 1.0 / math.sqrt(float(n))

    def pad_t(w, s=1.0):
        return jnp.pad((w * s).T, ((0, cp - c), (0, cp - c)))

    wqkv = jnp.concatenate([pad_t(wq, scale), pad_t(wk), pad_t(wv)], axis=1)
    return wqkv.astype(jnp.bfloat16)


@jax.jit
def sdm_forward(x_nchw, wqkv):
    """x_nchw: (B, C, H, W) float32.  wqkv: prepared (Cp, 3*Cp) bf16 fused weight."""
    B, C, H, W = x_nchw.shape
    N = H * W
    Cp = wqkv.shape[0]

    # Single layout pass over x: NCHW -> (B, N, C), fused with the bf16 cast.
    x_bnc = jnp.transpose(x_nchw.reshape(B, C, N), (0, 2, 1)).astype(jnp.bfloat16)

    kernel = functools.partial(_sdm_kernel, c=C, cp=Cp)
    scratch = [] if Cp == C else [pltpu.VMEM((N, Cp), jnp.bfloat16)]

    out_bnc = pl.pallas_call(
        kernel,
        out_shape=jax.ShapeDtypeStruct((B, N, C), jnp.float32),
        grid_spec=pltpu.PrefetchScalarGridSpec(
            num_scalar_prefetch=0,
            grid=(B,),
            in_specs=[
                # Unpadded channels: last block dim == full array dim, so no
                # HBM-side padding is needed to satisfy the (8,128) rule.
                pl.BlockSpec((1, N, C), lambda b: (b, 0, 0)),
                # Weights stay resident (constant index_map across the grid).
                pl.BlockSpec((Cp, 3 * Cp), lambda b: (0, 0)),
            ],
            out_specs=pl.BlockSpec((1, N, C), lambda b: (b, 0, 0)),
            scratch_shapes=scratch,
        ),
        compiler_params=pltpu.CompilerParams(
            dimension_semantics=("parallel",),   # batch shards across TCs on v7x
        ),
    )(x_bnc, wqkv)

    # PyTorch returns output.view(B, C, H, W): a raw reinterpretation of the
    # (B, N, C) buffer, NOT a transpose back to channel-major.
    return out_bnc.reshape(B, C, H, W)


def _reference(x_nchw, wq, wk, wv):
    B, C, H, W = x_nchw.shape
    N = H * W
    x = jnp.transpose(x_nchw.reshape(B, C, N), (0, 2, 1))        # (B, N, C)
    q = x @ wq.T
    k = jnp.swapaxes(x @ wk.T, -2, -1)                           # (B, C, N)
    v = x @ wv.T
    s = (q @ k) / jnp.sqrt(jnp.float32(N))
    a = jax.nn.softmax(s, axis=-1)
    o = a @ v                                                    # (B, N, C)
    return o.reshape(B, C, H, W)


if __name__ == "__main__":
    B, C, H, W = 2, 4, 16, 16  # embed_dim == C
    key = jax.random.PRNGKey(0)
    kx, kq, kk, kv = jax.random.split(key, 4)

    x = jax.random.normal(kx, (B, C, H, W), dtype=jnp.float32)
    # Deterministic Linear weight init (shape (out_features, in_features) = (C, C)),
    # uniform in [-1/sqrt(C), 1/sqrt(C)] like PyTorch's default.
    bound = 1.0 / math.sqrt(C)
    wq = jax.random.uniform(kq, (C, C), jnp.float32, -bound, bound)
    wk = jax.random.uniform(kk, (C, C), jnp.float32, -bound, bound)
    wv = jax.random.uniform(kv, (C, C), jnp.float32, -bound, bound)

    # Fused weight built once (module-parameter style), not per call.
    wqkv = prepare_sdm_weights(wq, wk, wv, H * W)

    out = sdm_forward(x, wqkv)
    out = jax.block_until_ready(out)

    ref = _reference(x, wq, wk, wv)
    assert out.shape == (B, C, H, W)
    # Tolerance sized for bf16 MXU operands (f32 accumulation, f32 softmax,
    # Newton-refined reciprocal); observed error is ~1e-3 level.
    assert jnp.allclose(out, ref, atol=1e-2, rtol=1e-2), "mismatch vs reference"

    print("KERNEL_OK")
</pallas_src>

<mosaic_0001>
module attributes {stable_mosaic.version = 11 : i64} {
  func.func @_sdm_kernel(%arg0: i32, %arg1: memref<1x256x4xbf16, #tpu.memory_space<vmem>>, %arg2: memref<128x384xbf16, #tpu.memory_space<vmem>>, %arg3: memref<1x256x4xf32, #tpu.memory_space<vmem>>, %arg4: memref<256x128xbf16, #tpu.memory_space<vmem>>) attributes {dimension_semantics = [#tpu.dimension_semantics<parallel>], iteration_bounds = array<i64: 2>, scalar_prefetch = 0 : i64, scratch_operands = 1 : i64, tpu.core_type = #tpu.core_type<tc>, window_params = [{transform_indices = @transform_0, window_bounds = array<i64: 1, 256, 4>}, {pipeline_mode = #tpu.pipeline_mode<synchronous>, transform_indices = @transform_1, window_bounds = array<i64: 128, 384>}, {transform_indices = @transform_2, window_bounds = array<i64: 1, 256, 4>}]} {
    %cst = arith.constant 0.000000e+00 : bf16
    %0 = vector.broadcast %cst : bf16 to vector<256x128xbf16>
    %c0 = arith.constant 0 : index
    %c0_0 = arith.constant 0 : index
    %1 = vector.load %arg4[%c0, %c0_0] : memref<256x128xbf16, #tpu.memory_space<vmem>>, vector<256x128xbf16>
    tpu.vector_store %arg4[%c0, %c0_0], %0 {strides = array<i32>} : memref<256x128xbf16, #tpu.memory_space<vmem>>, vector<256x128xbf16>,
    %c0_1 = arith.constant 0 : index
    %c0_2 = arith.constant 0 : index
    %c0_3 = arith.constant 0 : index
    %2 = vector.load %arg1[%c0_1, %c0_2, %c0_3] : memref<1x256x4xbf16, #tpu.memory_space<vmem>>, vector<1x256x4xbf16>
    %3 = vector.shape_cast %2 : vector<1x256x4xbf16> to vector<256x4xbf16>
    %c0_4 = arith.constant 0 : index
    %c0_5 = arith.constant 0 : index
    %4 = vector.load %arg4[%c0_4, %c0_5] : memref<256x128xbf16, #tpu.memory_space<vmem>>, vector<256x4xbf16>
    tpu.vector_store %arg4[%c0_4, %c0_5], %3 {strides = array<i32>} : memref<256x128xbf16, #tpu.memory_space<vmem>>, vector<256x4xbf16>,
    %c0_6 = arith.constant 0 : index
    %c0_7 = arith.constant 0 : index
    %5 = vector.load %arg4[%c0_6, %c0_7] : memref<256x128xbf16, #tpu.memory_space<vmem>>, vector<256x128xbf16>
    %c0_8 = arith.constant 0 : index
    %c0_9 = arith.constant 0 : index
    %6 = vector.load %arg2[%c0_8, %c0_9] : memref<128x384xbf16, #tpu.memory_space<vmem>>, vector<128x384xbf16>
    %cst_10 = arith.constant dense<0.000000e+00> : vector<256x384xf32>
    %7 = tpu.matmul %5, %6, %cst_10 {dimension_numbers = #tpu.dot_dimension_numbers<[1], [0], [0], [1], [0, 0, 1, 1], [], []>} : vector<256x128xbf16>, vector<128x384xbf16>, vector<256x384xf32> -> vector<256x384xf32>
    %8 = vector.extract_strided_slice %7 {offsets = [0, 0], sizes = [256, 128], strides = [1, 1]} : vector<256x384xf32> to vector<256x128xf32>
    %9 = arith.truncf %8 : vector<256x128xf32> to vector<256x128xbf16>
    %10 = vector.extract_strided_slice %7 {offsets = [0, 128], sizes = [256, 128], strides = [1, 1]} : vector<256x384xf32> to vector<256x128xf32>
    %11 = arith.truncf %10 : vector<256x128xf32> to vector<256x128xbf16>
    %12 = vector.extract_strided_slice %7 {offsets = [0, 256], sizes = [256, 128], strides = [1, 1]} : vector<256x384xf32> to vector<256x128xf32>
    %13 = arith.truncf %12 : vector<256x128xf32> to vector<256x128xbf16>
    %cst_11 = arith.constant dense<0.000000e+00> : vector<256x256xf32>
    %14 = tpu.matmul %9, %11, %cst_11 {dimension_numbers = #tpu.dot_dimension_numbers<[1], [1], [0], [0], [0, 0, 1, 0], [], []>} : vector<256x128xbf16>, vector<256x128xbf16>, vector<256x256xf32> -> vector<256x256xf32>
    %cst_12 = arith.constant dense<0xFF800000> : vector<256xf32>
    %15 = vector.multi_reduction <maximumf>, %14, %cst_12 [1] : vector<256x256xf32> to vector<256xf32>
    %16 = vector.shape_cast %15 : vector<256xf32> to vector<256x1xf32>
    %17 = vector.broadcast %16 : vector<256x1xf32> to vector<256x256xf32>
    %18 = arith.subf %14, %17 : vector<256x256xf32>
    %19 = math.exp %18 : vector<256x256xf32>
    %cst_13 = arith.constant dense<0.000000e+00> : vector<256xf32>
    %20 = vector.multi_reduction <add>, %19, %cst_13 [1] : vector<256x256xf32> to vector<256xf32>
    %21 = vector.shape_cast %20 : vector<256xf32> to vector<256x1xf32>
    %22 = tpu.reciprocal %21 {approx = true} : vector<256x1xf32> -> vector<256x1xf32>
    %23 = arith.mulf %21, %22 : vector<256x1xf32>
    %cst_14 = arith.constant 2.000000e+00 : f32
    %24 = vector.broadcast %cst_14 : f32 to vector<256x1xf32>
    %25 = arith.subf %24, %23 : vector<256x1xf32>
    %26 = arith.mulf %22, %25 : vector<256x1xf32>
    %27 = arith.truncf %19 : vector<256x256xf32> to vector<256x256xbf16>
    %cst_15 = arith.constant dense<0.000000e+00> : vector<256x128xf32>
    %28 = tpu.matmul %27, %13, %cst_15 {dimension_numbers = #tpu.dot_dimension_numbers<[1], [0], [0], [1], [0, 0, 1, 1], [], []>} : vector<256x256xbf16>, vector<256x128xbf16>, vector<256x128xf32> -> vector<256x128xf32>
    %29 = vector.extract_strided_slice %28 {offsets = [0, 0], sizes = [256, 4], strides = [1, 1]} : vector<256x128xf32> to vector<256x4xf32>
    %30 = vector.broadcast %26 : vector<256x1xf32> to vector<256x4xf32>
    %31 = arith.mulf %29, %30 : vector<256x4xf32>
    %c0_16 = arith.constant 0 : index
    %c0_17 = arith.constant 0 : index
    %c0_18 = arith.constant 0 : index
    %32 = vector.load %arg3[%c0_16, %c0_17, %c0_18] : memref<1x256x4xf32, #tpu.memory_space<vmem>>, vector<1x256x4xf32>
    %33 = vector.shape_cast %32 : vector<1x256x4xf32> to vector<256x4xf32>
    %34 = vector.shape_cast %31 : vector<256x4xf32> to vector<1x256x4xf32>
    tpu.vector_store %arg3[%c0_16, %c0_17, %c0_18], %34 {strides = array<i32>} : memref<1x256x4xf32, #tpu.memory_space<vmem>>, vector<1x256x4xf32>,
    return
  }
  func.func @transform_0(%arg0: i32) -> (i32, i32, i32) {
    %c0_i32 = arith.constant 0 : i32
    %c0_i32_0 = arith.constant 0 : i32
    %c0_i32_1 = arith.constant 0 : i32
    return %arg0, %c0_i32, %c0_i32_0 : i32, i32, i32
  }
  func.func @transform_1(%arg0: i32) -> (i32, i32) {
    %c0_i32 = arith.constant 0 : i32
    %c0_i32_0 = arith.constant 0 : i32
    %c0_i32_1 = arith.constant 0 : i32
    return %c0_i32, %c0_i32_0 : i32, i32
  }
  func.func @transform_2(%arg0: i32) -> (i32, i32, i32) {
    %c0_i32 = arith.constant 0 : i32
    %c0_i32_0 = arith.constant 0 : i32
    %c0_i32_1 = arith.constant 0 : i32
    return %arg0, %c0_i32, %c0_i32_0 : i32, i32, i32
  }
}

</mosaic_0001>

<llo_original>
// kernel: sdm_forward.1
$region0: #{sdm_forward.1}
  #allocation0 [shape = 'u32[]', space=smem, size = 0x4, offset = 0x4, fixed_abs, tag = 'smem constant byte address 0x4 - core index']
  #allocation1 [shape = 'u32[72,128]{1,0:T(1,128)}', space=vmem, size = 0x9000, scoped, tag = 'internal scratch']
  #allocation2 [shape = 'bf16[256,128]{1,0:T(8,128)(2,1)}', space=vmem, size = 0x10000, scoped, tag = 'scratch operand']
  %s0 = inlined_call_operand.vmem [shape: bf16[2,256,4], index: 0, kind: input, shape index: {}]
  %s1 = inlined_call_operand.vmem [shape: bf16[128,384], index: 1, kind: input, shape index: {}]
  %s2 = inlined_call_operand.vmem [shape: f32[2,256,4], index: 2, kind: output, shape index: {}]
  %s3 = sld [smem:[#allocation0]]
  $region41: #{sdm_forward.1} parent=0
    _
  %s5 = ssub.s32 1, %s3
  %s6 = scalar_select 0, %s5, %s3
  loop: start=0, step=1, limit=4
  $region2: #{sdm_forward.1} parent=0 // loop_pre_header
    _
  $region3: #{sdm_forward.1} parent=0 // loop_header
    %s8 = sphi 0, %s12
    %p9 = scmp.ge.s32.totalorder %s8, 4
    %s18 = sphi 0, %s20
    %s21 = sphi 0, %s18
    %s22 = sphi 0, %s21
    %s38 = sphi 0, %s22
    %s42 = sphi 0, %s42
    %s44 = sphi 0, %s42
    %s45 = sphi 0, %s44
    %s59 = sphi 0, %s45
    %s65 = sphi 0, %s67
    %s68 = sphi 0, %s65
    %s69 = sphi 0, %s68
    %s85 = sphi 0, %s69
  $region4: #{sdm_forward.1} parent=0 // loop_header_branch
    %11 = sbr.rel (%p9) target = $region8
  $region5: #{sdm_forward.1} parent=0 // loop_body
    %s13 = ssub.s32 %s8, 1
    %s14 = ssub.s32 %s8, 2
    %s15 = sadd.s32 %s8, 1
    %s16 = ssub.s32 %s8, %s15
    %p17 = scmp.eq.s32.totalorder %s16, 0
    %s19 = sadd.s32 %s18, 1
    %s20 = scalar_select %p17, %s18, %s19
    %p23 = pneg %p17
    %p24 = scmp.eq.s32.totalorder %s8, 1
    %p25 = por %p23, %p24
    %p26 = scmp.ne.s32.totalorder %s18, %s21
    %p27 = scmp.eq.s32.totalorder %s8, 0
    %p28 = por %p26, %p27
    %p29 = scmp.ne.s32.totalorder %s18, %s21
    %p30 = scmp.eq.s32.totalorder %s13, 1
    %p31 = por %p29, %p30
    %p32 = scmp.ne.s32.totalorder %s21, %s22
    %p33 = scmp.eq.s32.totalorder %s13, 0
    %p34 = por %p32, %p33
    %p35 = scmp.ne.s32.totalorder %s21, %s22
    %p36 = scmp.eq.s32.totalorder %s14, 1
    %p37 = por %p35, %p36
    %p39 = scmp.ne.s32.totalorder %s22, %s38
    %p40 = scmp.eq.s32.totalorder %s14, 0
    %p41 = por %p39, %p40
    %s43 = sadd.s32 %s42, 1
    %p46 = scmp.eq.s32.totalorder %s8, 1
    %p47 = scmp.ne.s32.totalorder %s42, %s44
    %p48 = scmp.eq.s32.totalorder %s8, 0
    %p49 = por %p47, %p48
    %p50 = scmp.ne.s32.totalorder %s42, %s44
    %p51 = scmp.eq.s32.totalorder %s13, 1
    %p52 = por %p50, %p51
    %p53 = scmp.ne.s32.totalorder %s44, %s45
    %p54 = scmp.eq.s32.totalorder %s13, 0
    %p55 = por %p53, %p54
    %p56 = scmp.ne.s32.totalorder %s44, %s45
    %p57 = scmp.eq.s32.totalorder %s14, 1
    %p58 = por %p56, %p57
    %p60 = scmp.ne.s32.totalorder %s45, %s59
    %p61 = scmp.eq.s32.totalorder %s14, 0
    %p62 = por %p60, %p61
    %s63 = ssub.s32 %s8, %s15
    %p64 = scmp.eq.s32.totalorder %s63, 0
    %s66 = sadd.s32 %s65, 1
    %s67 = scalar_select %p64, %s65, %s66
    %p70 = pneg %p64
    %p71 = scmp.eq.s32.totalorder %s8, 1
    %p72 = por %p70, %p71
    %p73 = scmp.ne.s32.totalorder %s65, %s68
    %p74 = scmp.eq.s32.totalorder %s8, 0
    %p75 = por %p73, %p74
    %p76 = scmp.ne.s32.totalorder %s65, %s68
    %p77 = scmp.eq.s32.totalorder %s13, 1
    %p78 = por %p76, %p77
    %p79 = scmp.ne.s32.totalorder %s68, %s69
    %p80 = scmp.eq.s32.totalorder %s13, 0
    %p81 = por %p79, %p80
    %p82 = scmp.ne.s32.totalorder %s68, %s69
    %p83 = scmp.eq.s32.totalorder %s14, 1
    %p84 = por %p82, %p83
    %p86 = scmp.ne.s32.totalorder %s69, %s85
    %p87 = scmp.eq.s32.totalorder %s14, 0
    %p88 = por %p86, %p87
    %p89 = scmp.le.s32.totalorder 1, %s8
    %p90 = scmp.lt.s32.totalorder %s8, 3
    %p91 = pnand %p89, %p90
    %p92 = pneg %p91
    // Predicated region
    $region9: #{sdm_forward.1} parent=5 // pred_check
      _
    $region10: #{sdm_forward.1} parent=5 // pred_check_branch
      %94 = sbr.rel (%p91) target = $region12
    $region11: #{sdm_forward.1} parent=5 // pred_region
      %s95 = ssub.s32 %s8, 1
      // Predicated region
      $region13: #{sdm_forward.1} parent=11 // pred_check
        %p96 = pneg %p55
      $region14: #{sdm_forward.1} parent=11 // pred_check_branch
        %98 = sbr.rel (%p96) target = $region16
      $region15: #{sdm_forward.1} parent=11 // pred_region
        _
      $region16: #{sdm_forward.1} parent=11 // pred_fallthru
        _
    $region12: #{sdm_forward.1} parent=5 // pred_fallthru
      _
    %p99 = scmp.lt.s32.totalorder %s8, 2
    // Predicated region
    $region17: #{sdm_forward.1} parent=5 // pred_check
      %p100 = pneg %p99
    $region18: #{sdm_forward.1} parent=5 // pred_check_branch
      %102 = sbr.rel (%p100) target = $region20
    $region19: #{sdm_forward.1} parent=5 // pred_region
      // Predicated region
      $region21: #{sdm_forward.1} parent=19 // pred_check
        %p103 = pneg %p28
      $region22: #{sdm_forward.1} parent=19 // pred_check_branch
        %105 = sbr.rel (%p103) target = $region24
      $region23: #{sdm_forward.1} parent=19 // pred_region
        %p106 = scmp.lt.s32.totalorder %s8, 1
        %s107 = scalar_select %p106, %s8, 1
        %s108 = smul.addr %s107, 32
        %s109 = smul.addr %s108, 4
        %s110 = scalar_lea.vmem %s0, %s109
      $region24: #{sdm_forward.1} parent=19 // pred_fallthru
        _
    $region20: #{sdm_forward.1} parent=5 // pred_fallthru
      _
    %p111 = scmp.le.s32.totalorder 1, %s8
    %p112 = scmp.lt.s32.totalorder %s8, 3
    %p113 = pnand %p111, %p112
    %p114 = pneg %p113
    // Predicated region
    $region25: #{sdm_forward.1} parent=5 // pred_check
      _
    $region26: #{sdm_forward.1} parent=5 // pred_check_branch
      %116 = sbr.rel (%p113) target = $region28
    $region27: #{sdm_forward.1} parent=5 // pred_region
      %s117 = ssub.s32 %s8, 1
      %p118 = scmp.lt.s32.totalorder %s13, 1
      %s119 = scalar_select %p118, %s13, 1
      %s120 = smul.addr %s119, 32
      %s121 = smul.addr %s120, 4
      %s122 = scalar_lea.vmem %s0, %s121
      %p123 = pneg %p34
      %p124 = pneg %p31
      %p125 = pneg %p55
      %p126 = pneg %p52
      %p127 = pneg %p81
      %p128 = pneg %p78
      %p129 = scmp.lt.s32.totalorder %s13, 1
      %s130 = scalar_select %p129, %s13, 1
      %s131 = smul.addr %s130, 32
      %s132 = smul.addr %s131, 8
      %s133 = scalar_lea.vmem %s2, %s132
      %p134 = scmp.lt.s32.totalorder %s13, 1
      %s135 = scalar_select %p134, %s13, 1
      %s136 = smul.addr %s135, 32
      %s137 = smul.addr %s136, 4
      %s138 = scalar_lea.vmem %s0, %s137
      %p139 = scmp.lt.s32.totalorder %s13, 1
      %s140 = scalar_select %p139, %s13, 1
      %s141 = smul.addr %s140, 32
      %s142 = smul.addr %s141, 8
      %s143 = scalar_lea.vmem %s2, %s142
      %145 = vst [vmem:[#allocation2] sm:$0xf] 0
      %146 = vst [vmem:[#allocation2 + $0x4] sm:$0xf] 0
      %147 = vst [vmem:[#allocation2 + $0x8] sm:$0xf] 0
      %148 = vst [vmem:[#allocation2 + $0xc] sm:$0xf] 0
      %149 = vst [vmem:[#allocation2 + $0x10] sm:$0xf] 0
      %150 = vst [vmem:[#allocation2 + $0x14] sm:$0xf] 0
      %151 = vst [vmem:[#allocation2 + $0x18] sm:$0xf] 0
      %152 = vst [vmem:[#allocation2 + $0x1c] sm:$0xf] 0
      %153 = vst [vmem:[#allocation2 + $0x20] sm:$0xf] 0
      %154 = vst [vmem:[#allocation2 + $0x24] sm:$0xf] 0
      %155 = vst [vmem:[#allocation2 + $0x28] sm:$0xf] 0
      %156 = vst [vmem:[#allocation2 + $0x2c] sm:$0xf] 0
      %157 = vst [vmem:[#allocation2 + $0x30] sm:$0xf] 0
      %158 = vst [vmem:[#allocation2 + $0x34] sm:$0xf] 0
      %159 = vst [vmem:[#allocation2 + $0x38] sm:$0xf] 0
      %160 = vst [vmem:[#allocation2 + $0x3c] sm:$0xf] 0
      %161 = vst [vmem:[#allocation2 + $0x40] sm:$0xf] 0
      %162 = vst [vmem:[#allocation2 + $0x44] sm:$0xf] 0
      %163 = vst [vmem:[#allocation2 + $0x48] sm:$0xf] 0
      %164 = vst [vmem:[#allocation2 + $0x4c] sm:$0xf] 0
      %165 = vst [vmem:[#allocation2 + $0x50] sm:$0xf] 0
      %166 = vst [vmem:[#allocation2 + $0x54] sm:$0xf] 0
      %167 = vst [vmem:[#allocation2 + $0x58] sm:$0xf] 0
      %168 = vst [vmem:[#allocation2 + $0x5c] sm:$0xf] 0
      %169 = vst [vmem:[#allocation2 + $0x60] sm:$0xf] 0
      %170 = vst [vmem:[#allocation2 + $0x64] sm:$0xf] 0
      %171 = vst [vmem:[#allocation2 + $0x68] sm:$0xf] 0
      %172 = vst [vmem:[#allocation2 + $0x6c] sm:$0xf] 0
      %173 = vst [vmem:[#allocation2 + $0x70] sm:$0xf] 0
      %174 = vst [vmem:[#allocation2 + $0x74] sm:$0xf] 0
      %175 = vst [vmem:[#allocation2 + $0x78] sm:$0xf] 0
      %176 = vst [vmem:[#allocation2 + $0x7c] sm:$0xf] 0
      %v177 = vld [vmem:[%s138] sm:$0xf]
      %v178 = vld [vmem:[%s138 + $0x4] sm:$0xf]
      %v179 = vld [vmem:[%s138 + $0x8] sm:$0xf]
      %v180 = vld [vmem:[%s138 + $0xc] sm:$0xf]
      %v181 = vld [vmem:[%s138 + $0x10] sm:$0xf]
      %v182 = vld [vmem:[%s138 + $0x14] sm:$0xf]
      %v183 = vld [vmem:[%s138 + $0x18] sm:$0xf]
      %v184 = vld [vmem:[%s138 + $0x1c] sm:$0xf]
      %v185 = vld [vmem:[%s138 + $0x20] sm:$0xf]
      %v186 = vld [vmem:[%s138 + $0x24] sm:$0xf]
      %v187 = vld [vmem:[%s138 + $0x28] sm:$0xf]
      %v188 = vld [vmem:[%s138 + $0x2c] sm:$0xf]
      %v189 = vld [vmem:[%s138 + $0x30] sm:$0xf]
      %v190 = vld [vmem:[%s138 + $0x34] sm:$0xf]
      %v191 = vld [vmem:[%s138 + $0x38] sm:$0xf]
      %v192 = vld [vmem:[%s138 + $0x3c] sm:$0xf]
      %v193 = vld [vmem:[%s138 + $0x40] sm:$0xf]
      %v194 = vld [vmem:[%s138 + $0x44] sm:$0xf]
      %v195 = vld [vmem:[%s138 + $0x48] sm:$0xf]
      %v196 = vld [vmem:[%s138 + $0x4c] sm:$0xf]
      %v197 = vld [vmem:[%s138 + $0x50] sm:$0xf]
      %v198 = vld [vmem:[%s138 + $0x54] sm:$0xf]
      %v199 = vld [vmem:[%s138 + $0x58] sm:$0xf]
      %v200 = vld [vmem:[%s138 + $0x5c] sm:$0xf]
      %v201 = vld [vmem:[%s138 + $0x60] sm:$0xf]
      %v202 = vld [vmem:[%s138 + $0x64] sm:$0xf]
      %v203 = vld [vmem:[%s138 + $0x68] sm:$0xf]
      %v204 = vld [vmem:[%s138 + $0x6c] sm:$0xf]
      %v205 = vld [vmem:[%s138 + $0x70] sm:$0xf]
      %v206 = vld [vmem:[%s138 + $0x74] sm:$0xf]
      %v207 = vld [vmem:[%s138 + $0x78] sm:$0xf]
      %v208 = vld [vmem:[%s138 + $0x7c] sm:$0xf]
      %vm209 = vcmask 27648
      %210 = vst.msk [vmem:[#allocation2] sm:$0xf] %vm209, %v177
      %211 = vst.msk [vmem:[#allocation2 + $0x4] sm:$0xf] %vm209, %v178
      %212 = vst.msk [vmem:[#allocation2 + $0x8] sm:$0xf] %vm209, %v179
      %213 = vst.msk [vmem:[#allocation2 + $0xc] sm:$0xf] %vm209, %v180
      %214 = vst.msk [vmem:[#allocation2 + $0x10] sm:$0xf] %vm209, %v181
      %215 = vst.msk [vmem:[#allocation2 + $0x14] sm:$0xf] %vm209, %v182
      %216 = vst.msk [vmem:[#allocation2 + $0x18] sm:$0xf] %vm209, %v183
      %217 = vst.msk [vmem:[#allocation2 + $0x1c] sm:$0xf] %vm209, %v184
      %218 = vst.msk [vmem:[#allocation2 + $0x20] sm:$0xf] %vm209, %v185
      %219 = vst.msk [vmem:[#allocation2 + $0x24] sm:$0xf] %vm209, %v186
      %220 = vst.msk [vmem:[#allocation2 + $0x28] sm:$0xf] %vm209, %v187
      %221 = vst.msk [vmem:[#allocation2 + $0x2c] sm:$0xf] %vm209, %v188
      %222 = vst.msk [vmem:[#allocation2 + $0x30] sm:$0xf] %vm209, %v189
      %223 = vst.msk [vmem:[#allocation2 + $0x34] sm:$0xf] %vm209, %v190
      %224 = vst.msk [vmem:[#allocation2 + $0x38] sm:$0xf] %vm209, %v191
      %225 = vst.msk [vmem:[#allocation2 + $0x3c] sm:$0xf] %vm209, %v192
      %226 = vst.msk [vmem:[#allocation2 + $0x40] sm:$0xf] %vm209, %v193
      %227 = vst.msk [vmem:[#allocation2 + $0x44] sm:$0xf] %vm209, %v194
      %228 = vst.msk [vmem:[#allocation2 + $0x48] sm:$0xf] %vm209, %v195
      %229 = vst.msk [vmem:[#allocation2 + $0x4c] sm:$0xf] %vm209, %v196
      %230 = vst.msk [vmem:[#allocation2 + $0x50] sm:$0xf] %vm209, %v197
      %231 = vst.msk [vmem:[#allocation2 + $0x54] sm:$0xf] %vm209, %v198
      %232 = vst.msk [vmem:[#allocation2 + $0x58] sm:$0xf] %vm209, %v199
      %233 = vst.msk [vmem:[#allocation2 + $0x5c] sm:$0xf] %vm209, %v200
      %234 = vst.msk [vmem:[#allocation2 + $0x60] sm:$0xf] %vm209, %v201
      %235 = vst.msk [vmem:[#allocation2 + $0x64] sm:$0xf] %vm209, %v202
      %236 = vst.msk [vmem:[#allocation2 + $0x68] sm:$0xf] %vm209, %v203
      %237 = vst.msk [vmem:[#allocation2 + $0x6c] sm:$0xf] %vm209, %v204
      %238 = vst.msk [vmem:[#allocation2 + $0x70] sm:$0xf] %vm209, %v205
      %239 = vst.msk [vmem:[#allocation2 + $0x74] sm:$0xf] %vm209, %v206
      %240 = vst.msk [vmem:[#allocation2 + $0x78] sm:$0xf] %vm209, %v207
      %241 = vst.msk [vmem:[#allocation2 + $0x7c] sm:$0xf] %vm209, %v208
      %v242 = vld [vmem:[#allocation2] sm:$0xf]
      %v243 = vld [vmem:[#allocation2 + $0x4] sm:$0xf]
      %v244 = vld [vmem:[#allocation2 + $0x8] sm:$0xf]
      %v245 = vld [vmem:[#allocation2 + $0xc] sm:$0xf]
      %v246 = vld [vmem:[#allocation2 + $0x10] sm:$0xf]
      %v247 = vld [vmem:[#allocation2 + $0x14] sm:$0xf]
      %v248 = vld [vmem:[#allocation2 + $0x18] sm:$0xf]
      %v249 = vld [vmem:[#allocation2 + $0x1c] sm:$0xf]
      %v250 = vld [vmem:[#allocation2 + $0x20] sm:$0xf]
      %v251 = vld [vmem:[#allocation2 + $0x24] sm:$0xf]
      %v252 = vld [vmem:[#allocation2 + $0x28] sm:$0xf]
      %v253 = vld [vmem:[#allocation2 + $0x2c] sm:$0xf]
      %v254 = vld [vmem:[#allocation2 + $0x30] sm:$0xf]
      %v255 = vld [vmem:[#allocation2 + $0x34] sm:$0xf]
      %v256 = vld [vmem:[#allocation2 + $0x38] sm:$0xf]
      %v257 = vld [vmem:[#allocation2 + $0x3c] sm:$0xf]
      %v258 = vld [vmem:[#allocation2 + $0x40] sm:$0xf]
      %v259 = vld [vmem:[#allocation2 + $0x44] sm:$0xf]
      %v260 = vld [vmem:[#allocation2 + $0x48] sm:$0xf]
      %v261 = vld [vmem:[#allocation2 + $0x4c] sm:$0xf]
      %v262 = vld [vmem:[#allocation2 + $0x50] sm:$0xf]
      %v263 = vld [vmem:[#allocation2 + $0x54] sm:$0xf]
      %v264 = vld [vmem:[#allocation2 + $0x58] sm:$0xf]
      %v265 = vld [vmem:[#allocation2 + $0x5c] sm:$0xf]
      %v266 = vld [vmem:[#allocation2 + $0x60] sm:$0xf]
      %v267 = vld [vmem:[#allocation2 + $0x64] sm:$0xf]
      %v268 = vld [vmem:[#allocation2 + $0x68] sm:$0xf]
      %v269 = vld [vmem:[#allocation2 + $0x6c] sm:$0xf]
      %v270 = vld [vmem:[#allocation2 + $0x70] sm:$0xf]
      %v271 = vld [vmem:[#allocation2 + $0x74] sm:$0xf]
      %v272 = vld [vmem:[#allocation2 + $0x78] sm:$0xf]
      %v273 = vld [vmem:[#allocation2 + $0x7c] sm:$0xf]
      %v274 = vld [vmem:[%s1] sm:$0xff]
      %v275 = vld [vmem:[%s1 + $0x8] sm:$0xf]
      %v276 = vld [vmem:[%s1 + $0xc] sm:$0xff]
      %v277 = vld [vmem:[%s1 + $0x14] sm:$0xf]
      %v278 = vld [vmem:[%s1 + $0x18] sm:$0xff]
      %v279 = vld [vmem:[%s1 + $0x20] sm:$0xf]
      %v280 = vld [vmem:[%s1 + $0x24] sm:$0xff]
      %v281 = vld [vmem:[%s1 + $0x2c] sm:$0xf]
      %v282 = vld [vmem:[%s1 + $0x30] sm:$0xff]
      %v283 = vld [vmem:[%s1 + $0x38] sm:$0xf]
      %v284 = vld [vmem:[%s1 + $0x3c] sm:$0xff]
      %v285 = vld [vmem:[%s1 + $0x44] sm:$0xf]
      %v286 = vld [vmem:[%s1 + $0x48] sm:$0xff]
      %v287 = vld [vmem:[%s1 + $0x50] sm:$0xf]
      %v288 = vld [vmem:[%s1 + $0x54] sm:$0xff]
      %v289 = vld [vmem:[%s1 + $0x5c] sm:$0xf]
      %v290 = vld [vmem:[%s1 + $0x60] sm:$0xff]
      %v291 = vld [vmem:[%s1 + $0x68] sm:$0xf]
      %v292 = vld [vmem:[%s1 + $0x6c] sm:$0xff]
      %v293 = vld [vmem:[%s1 + $0x74] sm:$0xf]
      %v294 = vld [vmem:[%s1 + $0x78] sm:$0xff]
      %v295 = vld [vmem:[%s1 + $0x80] sm:$0xf]
      %v296 = vld [vmem:[%s1 + $0x84] sm:$0xff]
      %v297 = vld [vmem:[%s1 + $0x8c] sm:$0xf]
      %v298 = vld [vmem:[%s1 + $0x90] sm:$0xff]
      %v299 = vld [vmem:[%s1 + $0x98] sm:$0xf]
      %v300 = vld [vmem:[%s1 + $0x9c] sm:$0xff]
      %v301 = vld [vmem:[%s1 + $0xa4] sm:$0xf]
      %v302 = vld [vmem:[%s1 + $0xa8] sm:$0xff]
      %v303 = vld [vmem:[%s1 + $0xb0] sm:$0xf]
      %v304 = vld [vmem:[%s1 + $0xb4] sm:$0xff]
      %v305 = vld [vmem:[%s1 + $0xbc] sm:$0xf]
      %v338 = vunpack.c.l.b16 %v242
      %v339 = vunpack.c.l.b16 %v243
      %v340 = vunpack.c.l.b16 %v244
      %v341 = vunpack.c.l.b16 %v245
      %v342 = vunpack.c.l.b16 %v246
      %v343 = vunpack.c.l.b16 %v247
      %v344 = vunpack.c.l.b16 %v248
      %v345 = vunpack.c.l.b16 %v249
      %v346 = vunpack.c.l.b16 %v250
      %v347 = vunpack.c.l.b16 %v251
      %v348 = vunpack.c.l.b16 %v252
      %v349 = vunpack.c.l.b16 %v253
      %v350 = vunpack.c.l.b16 %v254
      %v351 = vunpack.c.l.b16 %v255
      %v352 = vunpack.c.l.b16 %v256
      %v353 = vunpack.c.l.b16 %v257
      %v354 = vunpack.c.l.b16 %v258
      %v355 = vunpack.c.l.b16 %v259
      %v356 = vunpack.c.l.b16 %v260
      %v357 = vunpack.c.l.b16 %v261
      %v358 = vunpack.c.l.b16 %v262
      %v359 = vunpack.c.l.b16 %v263
      %v360 = vunpack.c.l.b16 %v264
      %v361 = vunpack.c.l.b16 %v265
      %v362 = vunpack.c.l.b16 %v266
      %v363 = vunpack.c.l.b16 %v267
      %v364 = vunpack.c.l.b16 %v268
      %v365 = vunpack.c.l.b16 %v269
      %v366 = vunpack.c.l.b16 %v270
      %v367 = vunpack.c.l.b16 %v271
      %v368 = vunpack.c.l.b16 %v272
      %v369 = vunpack.c.l.b16 %v273
      %v370 = vpack.c.b16 %v339, %v338
      %v371 = vpack.c.b16 %v341, %v340
      %v372 = vpack.c.b16 %v343, %v342
      %v373 = vpack.c.b16 %v345, %v344
      %v374 = vpack.c.b16 %v347, %v346
      %v375 = vpack.c.b16 %v349, %v348
      %v376 = vpack.c.b16 %v351, %v350
      %v377 = vpack.c.b16 %v353, %v352
      %v378 = vpack.c.b16 %v355, %v354
      %v379 = vpack.c.b16 %v357, %v356
      %v380 = vpack.c.b16 %v359, %v358
      %v381 = vpack.c.b16 %v361, %v360
      %v382 = vpack.c.b16 %v363, %v362
      %v383 = vpack.c.b16 %v365, %v364
      %v384 = vpack.c.b16 %v367, %v366
      %v385 = vpack.c.b16 %v369, %v368
      %v434 = vunpack.c.l.b16 %v274
      %v435 = vunpack.c.h.b16 %v274
      %v436 = vunpack.c.l.b16 %v275
      %v437 = vunpack.c.l.b16 %v276
      %v438 = vunpack.c.h.b16 %v276
      %v439 = vunpack.c.l.b16 %v277
      %v440 = vunpack.c.l.b16 %v278
      %v441 = vunpack.c.h.b16 %v278
      %v442 = vunpack.c.l.b16 %v279
      %v443 = vunpack.c.l.b16 %v280
      %v444 = vunpack.c.h.b16 %v280
      %v445 = vunpack.c.l.b16 %v281
      %v446 = vunpack.c.l.b16 %v282
      %v447 = vunpack.c.h.b16 %v282
      %v448 = vunpack.c.l.b16 %v283
      %v449 = vunpack.c.l.b16 %v284
      %v450 = vunpack.c.h.b16 %v284
      %v451 = vunpack.c.l.b16 %v285
      %v452 = vunpack.c.l.b16 %v286
      %v453 = vunpack.c.h.b16 %v286
      %v454 = vunpack.c.l.b16 %v287
      %v455 = vunpack.c.l.b16 %v288
      %v456 = vunpack.c.h.b16 %v288
      %v457 = vunpack.c.l.b16 %v289
      %v458 = vunpack.c.l.b16 %v290
      %v459 = vunpack.c.h.b16 %v290
      %v460 = vunpack.c.l.b16 %v291
      %v461 = vunpack.c.l.b16 %v292
      %v462 = vunpack.c.h.b16 %v292
      %v463 = vunpack.c.l.b16 %v293
      %v464 = vunpack.c.l.b16 %v294
      %v465 = vunpack.c.h.b16 %v294
      %v466 = vunpack.c.l.b16 %v295
      %v467 = vunpack.c.l.b16 %v296
      %v468 = vunpack.c.h.b16 %v296
      %v469 = vunpack.c.l.b16 %v297
      %v470 = vunpack.c.l.b16 %v298
      %v471 = vunpack.c.h.b16 %v298
      %v472 = vunpack.c.l.b16 %v299
      %v473 = vunpack.c.l.b16 %v300
      %v474 = vunpack.c.h.b16 %v300
      %v475 = vunpack.c.l.b16 %v301
      %v476 = vunpack.c.l.b16 %v302
      %v477 = vunpack.c.h.b16 %v302
      %v478 = vunpack.c.l.b16 %v303
      %v479 = vunpack.c.l.b16 %v304
      %v480 = vunpack.c.h.b16 %v304
      %v481 = vunpack.c.l.b16 %v305
      %v482 = vpack.c.b16 %v437, %v434
      %v483 = vpack.c.b16 %v438, %v435
      %v484 = vpack.c.b16 %v439, %v436
      %v485 = vpack.c.b16 %v443, %v440
      %v486 = vpack.c.b16 %v444, %v441
      %v487 = vpack.c.b16 %v445, %v442
      %v488 = vpack.c.b16 %v449, %v446
      %v489 = vpack.c.b16 %v450, %v447
      %v490 = vpack.c.b16 %v451, %v448
      %v491 = vpack.c.b16 %v455, %v452
      %v492 = vpack.c.b16 %v456, %v453
      %v493 = vpack.c.b16 %v457, %v454
      %v494 = vpack.c.b16 %v461, %v458
      %v495 = vpack.c.b16 %v462, %v459
      %v496 = vpack.c.b16 %v463, %v460
      %v497 = vpack.c.b16 %v467, %v464
      %v498 = vpack.c.b16 %v468, %v465
      %v499 = vpack.c.b16 %v469, %v466
      %v500 = vpack.c.b16 %v473, %v470
      %v501 = vpack.c.b16 %v474, %v471
      %v502 = vpack.c.b16 %v475, %v472
      %v503 = vpack.c.b16 %v479, %v476
      %v504 = vpack.c.b16 %v480, %v477
      %v505 = vpack.c.b16 %v481, %v478
      %530 = vmatpush.bf16.msra.mxu0 %v503
      %531 = vmatpush.bf16.msra.mxu0 %v500
      %532 = vmatpush.bf16.msra.mxu0 %v497
      %533 = vmatpush.bf16.msra.mxu0 %v494
      %534 = vmatpush.bf16.msra.mxu0 %v491
      %535 = vmatpush.bf16.msra.mxu0 %v488
      %536 = vmatpush.bf16.msra.mxu0 %v485
      %537 = vmatpush.bf16.msra.mxu0 %v482
      %538 = vmatmul.bf16.gmra.mxu0 %v370
      %v539 = vpop.f32.mrf.mxu0
      %v540 = vadd.f32 0.0, %v539
      %v541 = vpop.f32.mrf.mxu0
      %v542 = vadd.f32 0.0, %v541
      %543 = vmatmul.bf16.gmra.mxu0 %v371
      %v544 = vpop.f32.mrf.mxu0
      %v545 = vadd.f32 0.0, %v544
      %v546 = vpop.f32.mrf.mxu0
      %v547 = vadd.f32 0.0, %v546
      %548 = vmatmul.bf16.gmra.mxu0 %v372
      %v549 = vpop.f32.mrf.mxu0
      %v550 = vadd.f32 0.0, %v549
      %v551 = vpop.f32.mrf.mxu0
      %v552 = vadd.f32 0.0, %v551
      %553 = vmatmul.bf16.gmra.mxu0 %v373
      %v554 = vpop.f32.mrf.mxu0
      %v555 = vadd.f32 0.0, %v554
      %v556 = vpop.f32.mrf.mxu0
      %v557 = vadd.f32 0.0, %v556
      %558 = vmatmul.bf16.gmra.mxu0 %v374
      %v559 = vpop.f32.mrf.mxu0
      %v560 = vadd.f32 0.0, %v559
      %v561 = vpop.f32.mrf.mxu0
      %v562 = vadd.f32 0.0, %v561
      %563 = vmatmul.bf16.gmra.mxu0 %v375
      %v564 = vpop.f32.mrf.mxu0
      %v565 = vadd.f32 0.0, %v564
      %v566 = vpop.f32.mrf.mxu0
      %v567 = vadd.f32 0.0, %v566
      %568 = vmatmul.bf16.gmra.mxu0 %v376
      %v569 = vpop.f32.mrf.mxu0
      %v570 = vadd.f32 0.0, %v569
      %v571 = vpop.f32.mrf.mxu0
      %v572 = vadd.f32 0.0, %v571
      %573 = vmatmul.bf16.gmra.mxu0 %v377
      %v574 = vpop.f32.mrf.mxu0
      %v575 = vadd.f32 0.0, %v574
      %v576 = vpop.f32.mrf.mxu0
      %v577 = vadd.f32 0.0, %v576
      %578 = vmatmul.bf16.gmra.mxu0 %v378
      %v579 = vpop.f32.mrf.mxu0
      %v580 = vadd.f32 0.0, %v579
      %v581 = vpop.f32.mrf.mxu0
      %v582 = vadd.f32 0.0, %v581
      %583 = vmatmul.bf16.gmra.mxu0 %v379
      %v584 = vpop.f32.mrf.mxu0
      %v585 = vadd.f32 0.0, %v584
      %v586 = vpop.f32.mrf.mxu0
      %v587 = vadd.f32 0.0, %v586
      %588 = vmatmul.bf16.gmra.mxu0 %v380
      %v589 = vpop.f32.mrf.mxu0
      %v590 = vadd.f32 0.0, %v589
      %v591 = vpop.f32.mrf.mxu0
      %v592 = vadd.f32 0.0, %v591
      %593 = vmatmul.bf16.gmra.mxu0 %v381
      %v594 = vpop.f32.mrf.mxu0
      %v595 = vadd.f32 0.0, %v594
      %v596 = vpop.f32.mrf.mxu0
      %v597 = vadd.f32 0.0, %v596
      %598 = vmatmul.bf16.gmra.mxu0 %v382
      %v599 = vpop.f32.mrf.mxu0
      %v600 = vadd.f32 0.0, %v599
      %v601 = vpop.f32.mrf.mxu0
      %v602 = vadd.f32 0.0, %v601
      %603 = vmatmul.bf16.gmra.mxu0 %v383
      %v604 = vpop.f32.mrf.mxu0
      %v605 = vadd.f32 0.0, %v604
      %v606 = vpop.f32.mrf.mxu0
      %v607 = vadd.f32 0.0, %v606
      %608 = vmatmul.bf16.gmra.mxu0 %v384
      %v609 = vpop.f32.mrf.mxu0
      %v610 = vadd.f32 0.0, %v609
      %v611 = vpop.f32.mrf.mxu0
      %v612 = vadd.f32 0.0, %v611
      %613 = vmatmul.bf16.gmra.mxu0 %v385
      %v614 = vpop.f32.mrf.mxu0
      %v615 = vadd.f32 0.0, %v614
      %v616 = vpop.f32.mrf.mxu0
      %v617 = vadd.f32 0.0, %v616
      %618 = vdwg.mxu0
      %619 = vmatpush.bf16.msra.mxu0 %v504
      %620 = vmatpush.bf16.msra.mxu0 %v501
      %621 = vmatpush.bf16.msra.mxu0 %v498
      %622 = vmatpush.bf16.msra.mxu0 %v495
      %623 = vmatpush.bf16.msra.mxu0 %v492
      %624 = vmatpush.bf16.msra.mxu0 %v489
      %625 = vmatpush.bf16.msra.mxu0 %v486
      %626 = vmatpush.bf16.msra.mxu0 %v483
      %627 = vmatmul.bf16.gmra.mxu0 %v370
      %v628 = vpop.f32.mrf.mxu0
      %v629 = vadd.f32 0.0, %v628
      %v630 = vpop.f32.mrf.mxu0
      %v631 = vadd.f32 0.0, %v630
      %632 = vmatmul.bf16.gmra.mxu0 %v371
      %v633 = vpop.f32.mrf.mxu0
      %v634 = vadd.f32 0.0, %v633
      %v635 = vpop.f32.mrf.mxu0
      %v636 = vadd.f32 0.0, %v635
      %637 = vmatmul.bf16.gmra.mxu0 %v372
      %v638 = vpop.f32.mrf.mxu0
      %v639 = vadd.f32 0.0, %v638
      %v640 = vpop.f32.mrf.mxu0
      %v641 = vadd.f32 0.0, %v640
      %642 = vmatmul.bf16.gmra.mxu0 %v373
      %v643 = vpop.f32.mrf.mxu0
      %v644 = vadd.f32 0.0, %v643
      %v645 = vpop.f32.mrf.mxu0
      %v646 = vadd.f32 0.0, %v645
      %647 = vmatmul.bf16.gmra.mxu0 %v374
      %v648 = vpop.f32.mrf.mxu0
      %v649 = vadd.f32 0.0, %v648
      %v650 = vpop.f32.mrf.mxu0
      %v651 = vadd.f32 0.0, %v650
      %652 = vmatmul.bf16.gmra.mxu0 %v375
      %v653 = vpop.f32.mrf.mxu0
      %v654 = vadd.f32 0.0, %v653
      %v655 = vpop.f32.mrf.mxu0
      %v656 = vadd.f32 0.0, %v655
      %657 = vmatmul.bf16.gmra.mxu0 %v376
      %v658 = vpop.f32.mrf.mxu0
      %v659 = vadd.f32 0.0, %v658
      %v660 = vpop.f32.mrf.mxu0
      %v661 = vadd.f32 0.0, %v660
      %662 = vmatmul.bf16.gmra.mxu0 %v377
      %v663 = vpop.f32.mrf.mxu0
      %v664 = vadd.f32 0.0, %v663
      %v665 = vpop.f32.mrf.mxu0
      %v666 = vadd.f32 0.0, %v665
      %667 = vmatmul.bf16.gmra.mxu0 %v378
      %v668 = vpop.f32.mrf.mxu0
      %v669 = vadd.f32 0.0, %v668
      %v670 = vpop.f32.mrf.mxu0
      %v671 = vadd.f32 0.0, %v670
      %672 = vmatmul.bf16.gmra.mxu0 %v379
      %v673 = vpop.f32.mrf.mxu0
      %v674 = vadd.f32 0.0, %v673
      %v675 = vpop.f32.mrf.mxu0
      %v676 = vadd.f32 0.0, %v675
      %677 = vmatmul.bf16.gmra.mxu0 %v380
      %v678 = vpop.f32.mrf.mxu0
      %v679 = vadd.f32 0.0, %v678
      %v680 = vpop.f32.mrf.mxu0
      %v681 = vadd.f32 0.0, %v680
      %682 = vmatmul.bf16.gmra.mxu0 %v381
      %v683 = vpop.f32.mrf.mxu0
      %v684 = vadd.f32 0.0, %v683
      %v685 = vpop.f32.mrf.mxu0
      %v686 = vadd.f32 0.0, %v685
      %687 = vmatmul.bf16.gmra.mxu0 %v382
      %v688 = vpop.f32.mrf.mxu0
      %v689 = vadd.f32 0.0, %v688
      %v690 = vpop.f32.mrf.mxu0
      %v691 = vadd.f32 0.0, %v690
      %692 = vmatmul.bf16.gmra.mxu0 %v383
      %v693 = vpop.f32.mrf.mxu0
      %v694 = vadd.f32 0.0, %v693
      %v695 = vpop.f32.mrf.mxu0
      %v696 = vadd.f32 0.0, %v695
      %697 = vmatmul.bf16.gmra.mxu0 %v384
      %v698 = vpop.f32.mrf.mxu0
      %v699 = vadd.f32 0.0, %v698
      %v700 = vpop.f32.mrf.mxu0
      %v701 = vadd.f32 0.0, %v700
      %702 = vmatmul.bf16.gmra.mxu0 %v385
      %v703 = vpop.f32.mrf.mxu0
      %v704 = vadd.f32 0.0, %v703
      %v705 = vpop.f32.mrf.mxu0
      %v706 = vadd.f32 0.0, %v705
      %707 = vdwg.mxu0
      %708 = vmatpush.bf16.msra.mxu0 %v505
      %709 = vmatpush.bf16.msra.mxu0 %v502
      %710 = vmatpush.bf16.msra.mxu0 %v499
      %711 = vmatpush.bf16.msra.mxu0 %v496
      %712 = vmatpush.bf16.msra.mxu0 %v493
      %713 = vmatpush.bf16.msra.mxu0 %v490
      %714 = vmatpush.bf16.msra.mxu0 %v487
      %715 = vmatpush.bf16.msra.mxu0 %v484
      %716 = vmatmul.bf16.gmra.mxu0 %v370
      %v717 = vpop.f32.mrf.mxu0
      %v718 = vadd.f32 0.0, %v717
      %v719 = vpop.f32.mrf.mxu0
      %v720 = vadd.f32 0.0, %v719
      %721 = vmatmul.bf16.gmra.mxu0 %v371
      %v722 = vpop.f32.mrf.mxu0
      %v723 = vadd.f32 0.0, %v722
      %v724 = vpop.f32.mrf.mxu0
      %v725 = vadd.f32 0.0, %v724
      %726 = vmatmul.bf16.gmra.mxu0 %v372
      %v727 = vpop.f32.mrf.mxu0
      %v728 = vadd.f32 0.0, %v727
      %v729 = vpop.f32.mrf.mxu0
      %v730 = vadd.f32 0.0, %v729
      %731 = vmatmul.bf16.gmra.mxu0 %v373
      %v732 = vpop.f32.mrf.mxu0
      %v733 = vadd.f32 0.0, %v732
      %v734 = vpop.f32.mrf.mxu0
      %v735 = vadd.f32 0.0, %v734
      %736 = vmatmul.bf16.gmra.mxu0 %v374
      %v737 = vpop.f32.mrf.mxu0
      %v738 = vadd.f32 0.0, %v737
      %v739 = vpop.f32.mrf.mxu0
      %v740 = vadd.f32 0.0, %v739
      %741 = vmatmul.bf16.gmra.mxu0 %v375
      %v742 = vpop.f32.mrf.mxu0
      %v743 = vadd.f32 0.0, %v742
      %v744 = vpop.f32.mrf.mxu0
      %v745 = vadd.f32 0.0, %v744
      %746 = vmatmul.bf16.gmra.mxu0 %v376
      %v747 = vpop.f32.mrf.mxu0
      %v748 = vadd.f32 0.0, %v747
      %v749 = vpop.f32.mrf.mxu0
      %v750 = vadd.f32 0.0, %v749
      %751 = vmatmul.bf16.gmra.mxu0 %v377
      %v752 = vpop.f32.mrf.mxu0
      %v753 = vadd.f32 0.0, %v752
      %v754 = vpop.f32.mrf.mxu0
      %v755 = vadd.f32 0.0, %v754
      %756 = vmatmul.bf16.gmra.mxu0 %v378
      %v757 = vpop.f32.mrf.mxu0
      %v758 = vadd.f32 0.0, %v757
      %v759 = vpop.f32.mrf.mxu0
      %v760 = vadd.f32 0.0, %v759
      %761 = vmatmul.bf16.gmra.mxu0 %v379
      %v762 = vpop.f32.mrf.mxu0
      %v763 = vadd.f32 0.0, %v762
      %v764 = vpop.f32.mrf.mxu0
      %v765 = vadd.f32 0.0, %v764
      %766 = vmatmul.bf16.gmra.mxu0 %v380
      %v767 = vpop.f32.mrf.mxu0
      %v768 = vadd.f32 0.0, %v767
      %v769 = vpop.f32.mrf.mxu0
      %v770 = vadd.f32 0.0, %v769
      %771 = vmatmul.bf16.gmra.mxu0 %v381
      %v772 = vpop.f32.mrf.mxu0
      %v773 = vadd.f32 0.0, %v772
      %v774 = vpop.f32.mrf.mxu0
      %v775 = vadd.f32 0.0, %v774
      %776 = vmatmul.bf16.gmra.mxu0 %v382
      %v777 = vpop.f32.mrf.mxu0
      %v778 = vadd.f32 0.0, %v777
      %v779 = vpop.f32.mrf.mxu0
      %v780 = vadd.f32 0.0, %v779
      %781 = vmatmul.bf16.gmra.mxu0 %v383
      %v782 = vpop.f32.mrf.mxu0
      %v783 = vadd.f32 0.0, %v782
      %v784 = vpop.f32.mrf.mxu0
      %v785 = vadd.f32 0.0, %v784
      %786 = vmatmul.bf16.gmra.mxu0 %v384
      %v787 = vpop.f32.mrf.mxu0
      %v788 = vadd.f32 0.0, %v787
      %v789 = vpop.f32.mrf.mxu0
      %v790 = vadd.f32 0.0, %v789
      %791 = vmatmul.bf16.gmra.mxu0 %v385
      %v792 = vpop.f32.mrf.mxu0
      %v793 = vadd.f32 0.0, %v792
      %v794 = vpop.f32.mrf.mxu0
      %v795 = vadd.f32 0.0, %v794
      %796 = vdwg.mxu0
      %v797 = vpack.c.bf16 %v542, %v540
      %v798 = vpack.c.bf16 %v547, %v545
      %v799 = vpack.c.bf16 %v552, %v550
      %v800 = vpack.c.bf16 %v557, %v555
      %v801 = vpack.c.bf16 %v562, %v560
      %v802 = vpack.c.bf16 %v567, %v565
      %v803 = vpack.c.bf16 %v572, %v570
      %v804 = vpack.c.bf16 %v577, %v575
      %v805 = vpack.c.bf16 %v582, %v580
      %v806 = vpack.c.bf16 %v587, %v585
      %v807 = vpack.c.bf16 %v592, %v590
      %v808 = vpack.c.bf16 %v597, %v595
      %v809 = vpack.c.bf16 %v602, %v600
      %v810 = vpack.c.bf16 %v607, %v605
      %v811 = vpack.c.bf16 %v612, %v610
      %v812 = vpack.c.bf16 %v617, %v615
      %v813 = vpack.c.bf16 %v631, %v629
      %v814 = vpack.c.bf16 %v636, %v634
      %v815 = vpack.c.bf16 %v641, %v639
      %v816 = vpack.c.bf16 %v646, %v644
      %v817 = vpack.c.bf16 %v651, %v649
      %v818 = vpack.c.bf16 %v656, %v654
      %v819 = vpack.c.bf16 %v661, %v659
      %v820 = vpack.c.bf16 %v666, %v664
      %v821 = vpack.c.bf16 %v671, %v669
      %v822 = vpack.c.bf16 %v676, %v674
      %v823 = vpack.c.bf16 %v681, %v679
      %v824 = vpack.c.bf16 %v686, %v684
      %v825 = vpack.c.bf16 %v691, %v689
      %v826 = vpack.c.bf16 %v696, %v694
      %v827 = vpack.c.bf16 %v701, %v699
      %v828 = vpack.c.bf16 %v706, %v704
      %v829 = vpack.c.bf16 %v720, %v718
      %v830 = vpack.c.bf16 %v725, %v723
      %v831 = vpack.c.bf16 %v730, %v728
      %v832 = vpack.c.bf16 %v735, %v733
      %v833 = vpack.c.bf16 %v740, %v738
      %v834 = vpack.c.bf16 %v745, %v743
      %v835 = vpack.c.bf16 %v750, %v748
      %v836 = vpack.c.bf16 %v755, %v753
      %v837 = vpack.c.bf16 %v760, %v758
      %v838 = vpack.c.bf16 %v765, %v763
      %v839 = vpack.c.bf16 %v770, %v768
      %v840 = vpack.c.bf16 %v775, %v773
      %v841 = vpack.c.bf16 %v780, %v778
      %v842 = vpack.c.bf16 %v785, %v783
      %v843 = vpack.c.bf16 %v790, %v788
      %v844 = vpack.c.bf16 %v795, %v793
      %845 = vmatpush.bf16.xpose.msra.mxu0 %v820
      %846 = vmatpush.bf16.xpose.msra.mxu0 %v819
      %847 = vmatpush.bf16.xpose.msra.mxu0 %v818
      %848 = vmatpush.bf16.xpose.msra.mxu0 %v817
      %849 = vmatpush.bf16.xpose.msra.mxu0 %v816
      %850 = vmatpush.bf16.xpose.msra.mxu0 %v815
      %851 = vmatpush.bf16.xpose.msra.mxu0 %v814
      %852 = vmatpush.bf16.xpose.msra.mxu0 %v813
      %853 = vmatmul.bf16.gmra.mxu0 %v797
      %v854 = vpop.f32.mrf.mxu0
      %v855 = vadd.f32 0.0, %v854
      %v856 = vpop.f32.mrf.mxu0
      %v857 = vadd.f32 0.0, %v856
      %858 = vmatmul.bf16.gmra.mxu0 %v798
      %v859 = vpop.f32.mrf.mxu0
      %v860 = vadd.f32 0.0, %v859
      %v861 = vpop.f32.mrf.mxu0
      %v862 = vadd.f32 0.0, %v861
      %863 = vmatmul.bf16.gmra.mxu0 %v799
      %v864 = vpop.f32.mrf.mxu0
      %v865 = vadd.f32 0.0, %v864
      %v866 = vpop.f32.mrf.mxu0
      %v867 = vadd.f32 0.0, %v866
      %868 = vmatmul.bf16.gmra.mxu0 %v800
      %v869 = vpop.f32.mrf.mxu0
      %v870 = vadd.f32 0.0, %v869
      %v871 = vpop.f32.mrf.mxu0
      %v872 = vadd.f32 0.0, %v871
      %873 = vmatmul.bf16.gmra.mxu0 %v801
      %v874 = vpop.f32.mrf.mxu0
      %v875 = vadd.f32 0.0, %v874
      %v876 = vpop.f32.mrf.mxu0
      %v877 = vadd.f32 0.0, %v876
      %878 = vmatmul.bf16.gmra.mxu0 %v802
      %v879 = vpop.f32.mrf.mxu0
      %v880 = vadd.f32 0.0, %v879
      %v881 = vpop.f32.mrf.mxu0
      %v882 = vadd.f32 0.0, %v881
      %883 = vmatmul.bf16.gmra.mxu0 %v803
      %v884 = vpop.f32.mrf.mxu0
      %v885 = vadd.f32 0.0, %v884
      %v886 = vpop.f32.mrf.mxu0
      %v887 = vadd.f32 0.0, %v886
      %888 = vmatmul.bf16.gmra.mxu0 %v804
      %v889 = vpop.f32.mrf.mxu0
      %v890 = vadd.f32 0.0, %v889
      %v891 = vpop.f32.mrf.mxu0
      %v892 = vadd.f32 0.0, %v891
      %893 = vmatmul.bf16.gmra.mxu0 %v805
      %v894 = vpop.f32.mrf.mxu0
      %v895 = vadd.f32 0.0, %v894
      %v896 = vpop.f32.mrf.mxu0
      %v897 = vadd.f32 0.0, %v896
      %898 = vmatmul.bf16.gmra.mxu0 %v806
      %v899 = vpop.f32.mrf.mxu0
      %v900 = vadd.f32 0.0, %v899
      %v901 = vpop.f32.mrf.mxu0
      %v902 = vadd.f32 0.0, %v901
      %903 = vmatmul.bf16.gmra.mxu0 %v807
      %v904 = vpop.f32.mrf.mxu0
      %v905 = vadd.f32 0.0, %v904
      %v906 = vpop.f32.mrf.mxu0
      %v907 = vadd.f32 0.0, %v906
      %908 = vmatmul.bf16.gmra.mxu0 %v808
      %v909 = vpop.f32.mrf.mxu0
      %v910 = vadd.f32 0.0, %v909
      %v911 = vpop.f32.mrf.mxu0
      %v912 = vadd.f32 0.0, %v911
      %913 = vmatmul.bf16.gmra.mxu0 %v809
      %v914 = vpop.f32.mrf.mxu0
      %v915 = vadd.f32 0.0, %v914
      %v916 = vpop.f32.mrf.mxu0
      %v917 = vadd.f32 0.0, %v916
      %918 = vmatmul.bf16.gmra.mxu0 %v810
      %v919 = vpop.f32.mrf.mxu0
      %v920 = vadd.f32 0.0, %v919
      %v921 = vpop.f32.mrf.mxu0
      %v922 = vadd.f32 0.0, %v921
      %923 = vmatmul.bf16.gmra.mxu0 %v811
      %v924 = vpop.f32.mrf.mxu0
      %v925 = vadd.f32 0.0, %v924
      %v926 = vpop.f32.mrf.mxu0
      %v927 = vadd.f32 0.0, %v926
      %928 = vmatmul.bf16.gmra.mxu0 %v812
      %v929 = vpop.f32.mrf.mxu0
      %v930 = vadd.f32 0.0, %v929
      %v931 = vpop.f32.mrf.mxu0
      %v932 = vadd.f32 0.0, %v931
      %933 = vdwg.mxu0
      %934 = vmatpush.bf16.xpose.msra.mxu0 %v828
      %935 = vmatpush.bf16.xpose.msra.mxu0 %v827
      %936 = vmatpush.bf16.xpose.msra.mxu0 %v826
      %937 = vmatpush.bf16.xpose.msra.mxu0 %v825
      %938 = vmatpush.bf16.xpose.msra.mxu0 %v824
      %939 = vmatpush.bf16.xpose.msra.mxu0 %v823
      %940 = vmatpush.bf16.xpose.msra.mxu0 %v822
      %941 = vmatpush.bf16.xpose.msra.mxu0 %v821
      %942 = vmatmul.bf16.gmra.mxu0 %v797
      %v943 = vpop.f32.mrf.mxu0
      %v944 = vadd.f32 0.0, %v943
      %v945 = vpop.f32.mrf.mxu0
      %v946 = vadd.f32 0.0, %v945
      %947 = vmatmul.bf16.gmra.mxu0 %v798
      %v948 = vpop.f32.mrf.mxu0
      %v949 = vadd.f32 0.0, %v948
      %v950 = vpop.f32.mrf.mxu0
      %v951 = vadd.f32 0.0, %v950
      %952 = vmatmul.bf16.gmra.mxu0 %v799
      %v953 = vpop.f32.mrf.mxu0
      %v954 = vadd.f32 0.0, %v953
      %v955 = vpop.f32.mrf.mxu0
      %v956 = vadd.f32 0.0, %v955
      %957 = vmatmul.bf16.gmra.mxu0 %v800
      %v958 = vpop.f32.mrf.mxu0
      %v959 = vadd.f32 0.0, %v958
      %v960 = vpop.f32.mrf.mxu0
      %v961 = vadd.f32 0.0, %v960
      %962 = vmatmul.bf16.gmra.mxu0 %v801
      %v963 = vpop.f32.mrf.mxu0
      %v964 = vadd.f32 0.0, %v963
      %v965 = vpop.f32.mrf.mxu0
      %v966 = vadd.f32 0.0, %v965
      %967 = vmatmul.bf16.gmra.mxu0 %v802
      %v968 = vpop.f32.mrf.mxu0
      %v969 = vadd.f32 0.0, %v968
      %v970 = vpop.f32.mrf.mxu0
      %v971 = vadd.f32 0.0, %v970
      %972 = vmatmul.bf16.gmra.mxu0 %v803
      %v973 = vpop.f32.mrf.mxu0
      %v974 = vadd.f32 0.0, %v973
      %v975 = vpop.f32.mrf.mxu0
      %v976 = vadd.f32 0.0, %v975
      %977 = vmatmul.bf16.gmra.mxu0 %v804
      %v978 = vpop.f32.mrf.mxu0
      %v979 = vadd.f32 0.0, %v978
      %v980 = vpop.f32.mrf.mxu0
      %v981 = vadd.f32 0.0, %v980
      %982 = vmatmul.bf16.gmra.mxu0 %v805
      %v983 = vpop.f32.mrf.mxu0
      %v984 = vadd.f32 0.0, %v983
      %v985 = vpop.f32.mrf.mxu0
      %v986 = vadd.f32 0.0, %v985
      %987 = vmatmul.bf16.gmra.mxu0 %v806
      %v988 = vpop.f32.mrf.mxu0
      %v989 = vadd.f32 0.0, %v988
      %v990 = vpop.f32.mrf.mxu0
      %v991 = vadd.f32 0.0, %v990
      %992 = vmatmul.bf16.gmra.mxu0 %v807
      %v993 = vpop.f32.mrf.mxu0
      %v994 = vadd.f32 0.0, %v993
      %v995 = vpop.f32.mrf.mxu0
      %v996 = vadd.f32 0.0, %v995
      %997 = vmatmul.bf16.gmra.mxu0 %v808
      %v998 = vpop.f32.mrf.mxu0
      %v999 = vadd.f32 0.0, %v998
      %v1000 = vpop.f32.mrf.mxu0
      %v1001 = vadd.f32 0.0, %v1000
      %1002 = vmatmul.bf16.gmra.mxu0 %v809
      %v1003 = vpop.f32.mrf.mxu0
      %v1004 = vadd.f32 0.0, %v1003
      %v1005 = vpop.f32.mrf.mxu0
      %v1006 = vadd.f32 0.0, %v1005
      %1007 = vmatmul.bf16.gmra.mxu0 %v810
      %v1008 = vpop.f32.mrf.mxu0
      %v1009 = vadd.f32 0.0, %v1008
      %v1010 = vpop.f32.mrf.mxu0
      %v1011 = vadd.f32 0.0, %v1010
      %1012 = vmatmul.bf16.gmra.mxu0 %v811
      %v1013 = vpop.f32.mrf.mxu0
      %v1014 = vadd.f32 0.0, %v1013
      %v1015 = vpop.f32.mrf.mxu0
      %v1016 = vadd.f32 0.0, %v1015
      %1017 = vmatmul.bf16.gmra.mxu0 %v812
      %v1018 = vpop.f32.mrf.mxu0
      %v1019 = vadd.f32 0.0, %v1018
      %v1020 = vpop.f32.mrf.mxu0
      %v1021 = vadd.f32 0.0, %v1020
      %1022 = vdwg.mxu0
      %v1023 = vmax.f32 %v855, %v944
      %1024 = vmax.xlane.f32.xlu0 %v1023
      %v1025 = vpop.xlane.xlu0 %1024
      %v1026 = vmax.f32 %v857, %v946
      %1027 = vmax.xlane.f32.xlu0 %v1026
      %v1028 = vpop.xlane.xlu0 %1027
      %v1029 = vmax.f32 %v860, %v949
      %1030 = vmax.xlane.f32.xlu0 %v1029
      %v1031 = vpop.xlane.xlu0 %1030
      %v1032 = vmax.f32 %v862, %v951
      %1033 = vmax.xlane.f32.xlu0 %v1032
      %v1034 = vpop.xlane.xlu0 %1033
      %v1035 = vmax.f32 %v865, %v954
      %1036 = vmax.xlane.f32.xlu0 %v1035
      %v1037 = vpop.xlane.xlu0 %1036
      %v1038 = vmax.f32 %v867, %v956
      %1039 = vmax.xlane.f32.xlu0 %v1038
      %v1040 = vpop.xlane.xlu0 %1039
      %v1041 = vmax.f32 %v870, %v959
      %1042 = vmax.xlane.f32.xlu0 %v1041
      %v1043 = vpop.xlane.xlu0 %1042
      %v1044 = vmax.f32 %v872, %v961
      %1045 = vmax.xlane.f32.xlu0 %v1044
      %v1046 = vpop.xlane.xlu0 %1045
      %v1047 = vmax.f32 %v875, %v964
      %1048 = vmax.xlane.f32.xlu0 %v1047
      %v1049 = vpop.xlane.xlu0 %1048
      %v1050 = vmax.f32 %v877, %v966
      %1051 = vmax.xlane.f32.xlu0 %v1050
      %v1052 = vpop.xlane.xlu0 %1051
      %v1053 = vmax.f32 %v880, %v969
      %1054 = vmax.xlane.f32.xlu0 %v1053
      %v1055 = vpop.xlane.xlu0 %1054
      %v1056 = vmax.f32 %v882, %v971
      %1057 = vmax.xlane.f32.xlu0 %v1056
      %v1058 = vpop.xlane.xlu0 %1057
      %v1059 = vmax.f32 %v885, %v974
      %1060 = vmax.xlane.f32.xlu0 %v1059
      %v1061 = vpop.xlane.xlu0 %1060
      %v1062 = vmax.f32 %v887, %v976
      %1063 = vmax.xlane.f32.xlu0 %v1062
      %v1064 = vpop.xlane.xlu0 %1063
      %v1065 = vmax.f32 %v890, %v979
      %1066 = vmax.xlane.f32.xlu0 %v1065
      %v1067 = vpop.xlane.xlu0 %1066
      %v1068 = vmax.f32 %v892, %v981
      %1069 = vmax.xlane.f32.xlu0 %v1068
      %v1070 = vpop.xlane.xlu0 %1069
      %v1071 = vmax.f32 %v895, %v984
      %1072 = vmax.xlane.f32.xlu0 %v1071
      %v1073 = vpop.xlane.xlu0 %1072
      %v1074 = vmax.f32 %v897, %v986
      %1075 = vmax.xlane.f32.xlu0 %v1074
      %v1076 = vpop.xlane.xlu0 %1075
      %v1077 = vmax.f32 %v900, %v989
      %1078 = vmax.xlane.f32.xlu0 %v1077
      %v1079 = vpop.xlane.xlu0 %1078
      %v1080 = vmax.f32 %v902, %v991
      %1081 = vmax.xlane.f32.xlu0 %v1080
      %v1082 = vpop.xlane.xlu0 %1081
      %v1083 = vmax.f32 %v905, %v994
      %1084 = vmax.xlane.f32.xlu0 %v1083
      %v1085 = vpop.xlane.xlu0 %1084
      %v1086 = vmax.f32 %v907, %v996
      %1087 = vmax.xlane.f32.xlu0 %v1086
      %v1088 = vpop.xlane.xlu0 %1087
      %v1089 = vmax.f32 %v910, %v999
      %1090 = vmax.xlane.f32.xlu0 %v1089
      %v1091 = vpop.xlane.xlu0 %1090
      %v1092 = vmax.f32 %v912, %v1001
      %1093 = vmax.xlane.f32.xlu0 %v1092
      %v1094 = vpop.xlane.xlu0 %1093
      %v1095 = vmax.f32 %v915, %v1004
      %1096 = vmax.xlane.f32.xlu0 %v1095
      %v1097 = vpop.xlane.xlu0 %1096
      %v1098 = vmax.f32 %v917, %v1006
      %1099 = vmax.xlane.f32.xlu0 %v1098
      %v1100 = vpop.xlane.xlu0 %1099
      %v1101 = vmax.f32 %v920, %v1009
      %1102 = vmax.xlane.f32.xlu0 %v1101
      %v1103 = vpop.xlane.xlu0 %1102
      %v1104 = vmax.f32 %v922, %v1011
      %1105 = vmax.xlane.f32.xlu0 %v1104
      %v1106 = vpop.xlane.xlu0 %1105
      %v1107 = vmax.f32 %v925, %v1014
      %1108 = vmax.xlane.f32.xlu0 %v1107
      %v1109 = vpop.xlane.xlu0 %1108
      %v1110 = vmax.f32 %v927, %v1016
      %1111 = vmax.xlane.f32.xlu0 %v1110
      %v1112 = vpop.xlane.xlu0 %1111
      %v1113 = vmax.f32 %v930, %v1019
      %1114 = vmax.xlane.f32.xlu0 %v1113
      %v1115 = vpop.xlane.xlu0 %1114
      %v1116 = vmax.f32 %v932, %v1021
      %1117 = vmax.xlane.f32.xlu0 %v1116
      %v1118 = vpop.xlane.xlu0 %1117
      %v1119 = vsub.f32 %v855, %v1025
      %v1120 = vsub.f32 %v944, %v1025
      %v1121 = vsub.f32 %v857, %v1028
      %v1122 = vsub.f32 %v946, %v1028
      %v1123 = vsub.f32 %v860, %v1031
      %v1124 = vsub.f32 %v949, %v1031
      %v1125 = vsub.f32 %v862, %v1034
      %v1126 = vsub.f32 %v951, %v1034
      %v1127 = vsub.f32 %v865, %v1037
      %v1128 = vsub.f32 %v954, %v1037
      %v1129 = vsub.f32 %v867, %v1040
      %v1130 = vsub.f32 %v956, %v1040
      %v1131 = vsub.f32 %v870, %v1043
      %v1132 = vsub.f32 %v959, %v1043
      %v1133 = vsub.f32 %v872, %v1046
      %v1134 = vsub.f32 %v961, %v1046
      %v1135 = vsub.f32 %v875, %v1049
      %v1136 = vsub.f32 %v964, %v1049
      %v1137 = vsub.f32 %v877, %v1052
      %v1138 = vsub.f32 %v966, %v1052
      %v1139 = vsub.f32 %v880, %v1055
      %v1140 = vsub.f32 %v969, %v1055
      %v1141 = vsub.f32 %v882, %v1058
      %v1142 = vsub.f32 %v971, %v1058
      %v1143 = vsub.f32 %v885, %v1061
      %v1144 = vsub.f32 %v974, %v1061
      %v1145 = vsub.f32 %v887, %v1064
      %v1146 = vsub.f32 %v976, %v1064
      %v1147 = vsub.f32 %v890, %v1067
      %v1148 = vsub.f32 %v979, %v1067
      %v1149 = vsub.f32 %v892, %v1070
      %v1150 = vsub.f32 %v981, %v1070
      %v1151 = vsub.f32 %v895, %v1073
      %v1152 = vsub.f32 %v984, %v1073
      %v1153 = vsub.f32 %v897, %v1076
      %v1154 = vsub.f32 %v986, %v1076
      %v1155 = vsub.f32 %v900, %v1079
      %v1156 = vsub.f32 %v989, %v1079
      %v1157 = vsub.f32 %v902, %v1082
      %v1158 = vsub.f32 %v991, %v1082
      %v1159 = vsub.f32 %v905, %v1085
      %v1160 = vsub.f32 %v994, %v1085
      %v1161 = vsub.f32 %v907, %v1088
      %v1162 = vsub.f32 %v996, %v1088
      %v1163 = vsub.f32 %v910, %v1091
      %v1164 = vsub.f32 %v999, %v1091
      %v1165 = vsub.f32 %v912, %v1094
      %v1166 = vsub.f32 %v1001, %v1094
      %v1167 = vsub.f32 %v915, %v1097
      %v1168 = vsub.f32 %v1004, %v1097
      %v1169 = vsub.f32 %v917, %v1100
      %v1170 = vsub.f32 %v1006, %v1100
      %v1171 = vsub.f32 %v920, %v1103
      %v1172 = vsub.f32 %v1009, %v1103
      %v1173 = vsub.f32 %v922, %v1106
      %v1174 = vsub.f32 %v1011, %v1106
      %v1175 = vsub.f32 %v925, %v1109
      %v1176 = vsub.f32 %v1014, %v1109
      %v1177 = vsub.f32 %v927, %v1112
      %v1178 = vsub.f32 %v1016, %v1112
      %v1179 = vsub.f32 %v930, %v1115
      %v1180 = vsub.f32 %v1019, %v1115
      %v1181 = vsub.f32 %v932, %v1118
      %v1182 = vsub.f32 %v1021, %v1118
      %v1183 = vmul.f32 %v1119, 1.442695
      %v1184 = vpow.pop %v1183
      %v1185 = vmul.f32 %v1120, 1.442695
      %v1186 = vpow.pop %v1185
      %v1187 = vmul.f32 %v1121, 1.442695
      %v1188 = vpow.pop %v1187
      %v1189 = vmul.f32 %v1122, 1.442695
      %v1190 = vpow.pop %v1189
      %v1191 = vmul.f32 %v1123, 1.442695
      %v1192 = vpow.pop %v1191
      %v1193 = vmul.f32 %v1124, 1.442695
      %v1194 = vpow.pop %v1193
      %v1195 = vmul.f32 %v1125, 1.442695
      %v1196 = vpow.pop %v1195
      %v1197 = vmul.f32 %v1126, 1.442695
      %v1198 = vpow.pop %v1197
      %v1199 = vmul.f32 %v1127, 1.442695
      %v1200 = vpow.pop %v1199
      %v1201 = vmul.f32 %v1128, 1.442695
      %v1202 = vpow.pop %v1201
      %v1203 = vmul.f32 %v1129, 1.442695
      %v1204 = vpow.pop %v1203
      %v1205 = vmul.f32 %v1130, 1.442695
      %v1206 = vpow.pop %v1205
      %v1207 = vmul.f32 %v1131, 1.442695
      %v1208 = vpow.pop %v1207
      %v1209 = vmul.f32 %v1132, 1.442695
      %v1210 = vpow.pop %v1209
      %v1211 = vmul.f32 %v1133, 1.442695
      %v1212 = vpow.pop %v1211
      %v1213 = vmul.f32 %v1134, 1.442695
      %v1214 = vpow.pop %v1213
      %v1215 = vmul.f32 %v1135, 1.442695
      %v1216 = vpow.pop %v1215
      %v1217 = vmul.f32 %v1136, 1.442695
      %v1218 = vpow.pop %v1217
      %v1219 = vmul.f32 %v1137, 1.442695
      %v1220 = vpow.pop %v1219
      %v1221 = vmul.f32 %v1138, 1.442695
      %v1222 = vpow.pop %v1221
      %v1223 = vmul.f32 %v1139, 1.442695
      %v1224 = vpow.pop %v1223
      %v1225 = vmul.f32 %v1140, 1.442695
      %v1226 = vpow.pop %v1225
      %v1227 = vmul.f32 %v1141, 1.442695
      %v1228 = vpow.pop %v1227
      %v1229 = vmul.f32 %v1142, 1.442695
      %v1230 = vpow.pop %v1229
      %v1231 = vmul.f32 %v1143, 1.442695
      %v1232 = vpow.pop %v1231
      %v1233 = vmul.f32 %v1144, 1.442695
      %v1234 = vpow.pop %v1233
      %v1235 = vmul.f32 %v1145, 1.442695
      %v1236 = vpow.pop %v1235
      %v1237 = vmul.f32 %v1146, 1.442695
      %v1238 = vpow.pop %v1237
      %v1239 = vmul.f32 %v1147, 1.442695
      %v1240 = vpow.pop %v1239
      %v1241 = vmul.f32 %v1148, 1.442695
      %v1242 = vpow.pop %v1241
      %v1243 = vmul.f32 %v1149, 1.442695
      %v1244 = vpow.pop %v1243
      %v1245 = vmul.f32 %v1150, 1.442695
      %v1246 = vpow.pop %v1245
      %v1247 = vmul.f32 %v1151, 1.442695
      %v1248 = vpow.pop %v1247
      %v1249 = vmul.f32 %v1152, 1.442695
      %v1250 = vpow.pop %v1249
      %v1251 = vmul.f32 %v1153, 1.442695
      %v1252 = vpow.pop %v1251
      %v1253 = vmul.f32 %v1154, 1.442695
      %v1254 = vpow.pop %v1253
      %v1255 = vmul.f32 %v1155, 1.442695
      %v1256 = vpow.pop %v1255
      %v1257 = vmul.f32 %v1156, 1.442695
      %v1258 = vpow.pop %v1257
      %v1259 = vmul.f32 %v1157, 1.442695
      %v1260 = vpow.pop %v1259
      %v1261 = vmul.f32 %v1158, 1.442695
      %v1262 = vpow.pop %v1261
      %v1263 = vmul.f32 %v1159, 1.442695
      %v1264 = vpow.pop %v1263
      %v1265 = vmul.f32 %v1160, 1.442695
      %v1266 = vpow.pop %v1265
      %v1267 = vmul.f32 %v1161, 1.442695
      %v1268 = vpow.pop %v1267
      %v1269 = vmul.f32 %v1162, 1.442695
      %v1270 = vpow.pop %v1269
      %v1271 = vmul.f32 %v1163, 1.442695
      %v1272 = vpow.pop %v1271
      %v1273 = vmul.f32 %v1164, 1.442695
      %v1274 = vpow.pop %v1273
      %v1275 = vmul.f32 %v1165, 1.442695
      %v1276 = vpow.pop %v1275
      %v1277 = vmul.f32 %v1166, 1.442695
      %v1278 = vpow.pop %v1277
      %v1279 = vmul.f32 %v1167, 1.442695
      %v1280 = vpow.pop %v1279
      %v1281 = vmul.f32 %v1168, 1.442695
      %v1282 = vpow.pop %v1281
      %v1283 = vmul.f32 %v1169, 1.442695
      %v1284 = vpow.pop %v1283
      %v1285 = vmul.f32 %v1170, 1.442695
      %v1286 = vpow.pop %v1285
      %v1287 = vmul.f32 %v1171, 1.442695
      %v1288 = vpow.pop %v1287
      %v1289 = vmul.f32 %v1172, 1.442695
      %v1290 = vpow.pop %v1289
      %v1291 = vmul.f32 %v1173, 1.442695
      %v1292 = vpow.pop %v1291
      %v1293 = vmul.f32 %v1174, 1.442695
      %v1294 = vpow.pop %v1293
      %v1295 = vmul.f32 %v1175, 1.442695
      %v1296 = vpow.pop %v1295
      %v1297 = vmul.f32 %v1176, 1.442695
      %v1298 = vpow.pop %v1297
      %v1299 = vmul.f32 %v1177, 1.442695
      %v1300 = vpow.pop %v1299
      %v1301 = vmul.f32 %v1178, 1.442695
      %v1302 = vpow.pop %v1301
      %v1303 = vmul.f32 %v1179, 1.442695
      %v1304 = vpow.pop %v1303
      %v1305 = vmul.f32 %v1180, 1.442695
      %v1306 = vpow.pop %v1305
      %v1307 = vmul.f32 %v1181, 1.442695
      %v1308 = vpow.pop %v1307
      %v1309 = vmul.f32 %v1182, 1.442695
      %v1310 = vpow.pop %v1309
      %v1311 = vadd.f32 %v1184, %v1186
      %1312 = vadd.xlane.f32.xlu0 %v1311
      %v1313 = vpop.xlane.xlu0 %1312
      %v1314 = vadd.f32 %v1188, %v1190
      %1315 = vadd.xlane.f32.xlu0 %v1314
      %v1316 = vpop.xlane.xlu0 %1315
      %v1317 = vadd.f32 %v1192, %v1194
      %1318 = vadd.xlane.f32.xlu0 %v1317
      %v1319 = vpop.xlane.xlu0 %1318
      %v1320 = vadd.f32 %v1196, %v1198
      %1321 = vadd.xlane.f32.xlu0 %v1320
      %v1322 = vpop.xlane.xlu0 %1321
      %v1323 = vadd.f32 %v1200, %v1202
      %1324 = vadd.xlane.f32.xlu0 %v1323
      %v1325 = vpop.xlane.xlu0 %1324
      %v1326 = vadd.f32 %v1204, %v1206
      %1327 = vadd.xlane.f32.xlu0 %v1326
      %v1328 = vpop.xlane.xlu0 %1327
      %v1329 = vadd.f32 %v1208, %v1210
      %1330 = vadd.xlane.f32.xlu0 %v1329
      %v1331 = vpop.xlane.xlu0 %1330
      %v1332 = vadd.f32 %v1212, %v1214
      %1333 = vadd.xlane.f32.xlu0 %v1332
      %v1334 = vpop.xlane.xlu0 %1333
      %v1335 = vadd.f32 %v1216, %v1218
      %1336 = vadd.xlane.f32.xlu0 %v1335
      %v1337 = vpop.xlane.xlu0 %1336
      %v1338 = vadd.f32 %v1220, %v1222
      %1339 = vadd.xlane.f32.xlu0 %v1338
      %v1340 = vpop.xlane.xlu0 %1339
      %v1341 = vadd.f32 %v1224, %v1226
      %1342 = vadd.xlane.f32.xlu0 %v1341
      %v1343 = vpop.xlane.xlu0 %1342
      %v1344 = vadd.f32 %v1228, %v1230
      %1345 = vadd.xlane.f32.xlu0 %v1344
      %v1346 = vpop.xlane.xlu0 %1345
      %v1347 = vadd.f32 %v1232, %v1234
      %1348 = vadd.xlane.f32.xlu0 %v1347
      %v1349 = vpop.xlane.xlu0 %1348
      %v1350 = vadd.f32 %v1236, %v1238
      %1351 = vadd.xlane.f32.xlu0 %v1350
      %v1352 = vpop.xlane.xlu0 %1351
      %v1353 = vadd.f32 %v1240, %v1242
      %1354 = vadd.xlane.f32.xlu0 %v1353
      %v1355 = vpop.xlane.xlu0 %1354
      %v1356 = vadd.f32 %v1244, %v1246
      %1357 = vadd.xlane.f32.xlu0 %v1356
      %v1358 = vpop.xlane.xlu0 %1357
      %v1359 = vadd.f32 %v1248, %v1250
      %1360 = vadd.xlane.f32.xlu0 %v1359
      %v1361 = vpop.xlane.xlu0 %1360
      %v1362 = vadd.f32 %v1252, %v1254
      %1363 = vadd.xlane.f32.xlu0 %v1362
      %v1364 = vpop.xlane.xlu0 %1363
      %v1365 = vadd.f32 %v1256, %v1258
      %1366 = vadd.xlane.f32.xlu0 %v1365
      %v1367 = vpop.xlane.xlu0 %1366
      %v1368 = vadd.f32 %v1260, %v1262
      %1369 = vadd.xlane.f32.xlu0 %v1368
      %v1370 = vpop.xlane.xlu0 %1369
      %v1371 = vadd.f32 %v1264, %v1266
      %1372 = vadd.xlane.f32.xlu0 %v1371
      %v1373 = vpop.xlane.xlu0 %1372
      %v1374 = vadd.f32 %v1268, %v1270
      %1375 = vadd.xlane.f32.xlu0 %v1374
      %v1376 = vpop.xlane.xlu0 %1375
      %v1377 = vadd.f32 %v1272, %v1274
      %1378 = vadd.xlane.f32.xlu0 %v1377
      %v1379 = vpop.xlane.xlu0 %1378
      %v1380 = vadd.f32 %v1276, %v1278
      %1381 = vadd.xlane.f32.xlu0 %v1380
      %v1382 = vpop.xlane.xlu0 %1381
      %v1383 = vadd.f32 %v1280, %v1282
      %1384 = vadd.xlane.f32.xlu0 %v1383
      %v1385 = vpop.xlane.xlu0 %1384
      %v1386 = vadd.f32 %v1284, %v1286
      %1387 = vadd.xlane.f32.xlu0 %v1386
      %v1388 = vpop.xlane.xlu0 %1387
      %v1389 = vadd.f32 %v1288, %v1290
      %1390 = vadd.xlane.f32.xlu0 %v1389
      %v1391 = vpop.xlane.xlu0 %1390
      %v1392 = vadd.f32 %v1292, %v1294
      %1393 = vadd.xlane.f32.xlu0 %v1392
      %v1394 = vpop.xlane.xlu0 %1393
      %v1395 = vadd.f32 %v1296, %v1298
      %1396 = vadd.xlane.f32.xlu0 %v1395
      %v1397 = vpop.xlane.xlu0 %1396
      %v1398 = vadd.f32 %v1300, %v1302
      %1399 = vadd.xlane.f32.xlu0 %v1398
      %v1400 = vpop.xlane.xlu0 %1399
      %v1401 = vadd.f32 %v1304, %v1306
      %1402 = vadd.xlane.f32.xlu0 %v1401
      %v1403 = vpop.xlane.xlu0 %1402
      %v1404 = vadd.f32 %v1308, %v1310
      %1405 = vadd.xlane.f32.xlu0 %v1404
      %v1406 = vpop.xlane.xlu0 %1405
      %v1407 = vrcp.pop %v1313
      %v1408 = vrcp.pop %v1316
      %v1409 = vrcp.pop %v1319
      %v1410 = vrcp.pop %v1322
      %v1411 = vrcp.pop %v1325
      %v1412 = vrcp.pop %v1328
      %v1413 = vrcp.pop %v1331
      %v1414 = vrcp.pop %v1334
      %v1415 = vrcp.pop %v1337
      %v1416 = vrcp.pop %v1340
      %v1417 = vrcp.pop %v1343
      %v1418 = vrcp.pop %v1346
      %v1419 = vrcp.pop %v1349
      %v1420 = vrcp.pop %v1352
      %v1421 = vrcp.pop %v1355
      %v1422 = vrcp.pop %v1358
      %v1423 = vrcp.pop %v1361
      %v1424 = vrcp.pop %v1364
      %v1425 = vrcp.pop %v1367
      %v1426 = vrcp.pop %v1370
      %v1427 = vrcp.pop %v1373
      %v1428 = vrcp.pop %v1376
      %v1429 = vrcp.pop %v1379
      %v1430 = vrcp.pop %v1382
      %v1431 = vrcp.pop %v1385
      %v1432 = vrcp.pop %v1388
      %v1433 = vrcp.pop %v1391
      %v1434 = vrcp.pop %v1394
      %v1435 = vrcp.pop %v1397
      %v1436 = vrcp.pop %v1400
      %v1437 = vrcp.pop %v1403
      %v1438 = vrcp.pop %v1406
      %v1439 = vmul.f32 %v1313, %v1407
      %v1440 = vmul.f32 %v1316, %v1408
      %v1441 = vmul.f32 %v1319, %v1409
      %v1442 = vmul.f32 %v1322, %v1410
      %v1443 = vmul.f32 %v1325, %v1411
      %v1444 = vmul.f32 %v1328, %v1412
      %v1445 = vmul.f32 %v1331, %v1413
      %v1446 = vmul.f32 %v1334, %v1414
      %v1447 = vmul.f32 %v1337, %v1415
      %v1448 = vmul.f32 %v1340, %v1416
      %v1449 = vmul.f32 %v1343, %v1417
      %v1450 = vmul.f32 %v1346, %v1418
      %v1451 = vmul.f32 %v1349, %v1419
      %v1452 = vmul.f32 %v1352, %v1420
      %v1453 = vmul.f32 %v1355, %v1421
      %v1454 = vmul.f32 %v1358, %v1422
      %v1455 = vmul.f32 %v1361, %v1423
      %v1456 = vmul.f32 %v1364, %v1424
      %v1457 = vmul.f32 %v1367, %v1425
      %v1458 = vmul.f32 %v1370, %v1426
      %v1459 = vmul.f32 %v1373, %v1427
      %v1460 = vmul.f32 %v1376, %v1428
      %v1461 = vmul.f32 %v1379, %v1429
      %v1462 = vmul.f32 %v1382, %v1430
      %v1463 = vmul.f32 %v1385, %v1431
      %v1464 = vmul.f32 %v1388, %v1432
      %v1465 = vmul.f32 %v1391, %v1433
      %v1466 = vmul.f32 %v1394, %v1434
      %v1467 = vmul.f32 %v1397, %v1435
      %v1468 = vmul.f32 %v1400, %v1436
      %v1469 = vmul.f32 %v1403, %v1437
      %v1470 = vmul.f32 %v1406, %v1438
      %v1471 = vsub.f32 2.0, %v1439
      %v1472 = vsub.f32 2.0, %v1440
      %v1473 = vsub.f32 2.0, %v1441
      %v1474 = vsub.f32 2.0, %v1442
      %v1475 = vsub.f32 2.0, %v1443
      %v1476 = vsub.f32 2.0, %v1444
      %v1477 = vsub.f32 2.0, %v1445
      %v1478 = vsub.f32 2.0, %v1446
      %v1479 = vsub.f32 2.0, %v1447
      %v1480 = vsub.f32 2.0, %v1448
      %v1481 = vsub.f32 2.0, %v1449
      %v1482 = vsub.f32 2.0, %v1450
      %v1483 = vsub.f32 2.0, %v1451
      %v1484 = vsub.f32 2.0, %v1452
      %v1485 = vsub.f32 2.0, %v1453
      %v1486 = vsub.f32 2.0, %v1454
      %v1487 = vsub.f32 2.0, %v1455
      %v1488 = vsub.f32 2.0, %v1456
      %v1489 = vsub.f32 2.0, %v1457
      %v1490 = vsub.f32 2.0, %v1458
      %v1491 = vsub.f32 2.0, %v1459
      %v1492 = vsub.f32 2.0, %v1460
      %v1493 = vsub.f32 2.0, %v1461
      %v1494 = vsub.f32 2.0, %v1462
      %v1495 = vsub.f32 2.0, %v1463
      %v1496 = vsub.f32 2.0, %v1464
      %v1497 = vsub.f32 2.0, %v1465
      %v1498 = vsub.f32 2.0, %v1466
      %v1499 = vsub.f32 2.0, %v1467
      %v1500 = vsub.f32 2.0, %v1468
      %v1501 = vsub.f32 2.0, %v1469
      %v1502 = vsub.f32 2.0, %v1470
      %v1503 = vmul.f32 %v1407, %v1471
      %v1504 = vmul.f32 %v1408, %v1472
      %v1505 = vmul.f32 %v1409, %v1473
      %v1506 = vmul.f32 %v1410, %v1474
      %v1507 = vmul.f32 %v1411, %v1475
      %v1508 = vmul.f32 %v1412, %v1476
      %v1509 = vmul.f32 %v1413, %v1477
      %v1510 = vmul.f32 %v1414, %v1478
      %v1511 = vmul.f32 %v1415, %v1479
      %v1512 = vmul.f32 %v1416, %v1480
      %v1513 = vmul.f32 %v1417, %v1481
      %v1514 = vmul.f32 %v1418, %v1482
      %v1515 = vmul.f32 %v1419, %v1483
      %v1516 = vmul.f32 %v1420, %v1484
      %v1517 = vmul.f32 %v1421, %v1485
      %v1518 = vmul.f32 %v1422, %v1486
      %v1519 = vmul.f32 %v1423, %v1487
      %v1520 = vmul.f32 %v1424, %v1488
      %v1521 = vmul.f32 %v1425, %v1489
      %v1522 = vmul.f32 %v1426, %v1490
      %v1523 = vmul.f32 %v1427, %v1491
      %v1524 = vmul.f32 %v1428, %v1492
      %v1525 = vmul.f32 %v1429, %v1493
      %v1526 = vmul.f32 %v1430, %v1494
      %v1527 = vmul.f32 %v1431, %v1495
      %v1528 = vmul.f32 %v1432, %v1496
      %v1529 = vmul.f32 %v1433, %v1497
      %v1530 = vmul.f32 %v1434, %v1498
      %v1531 = vmul.f32 %v1435, %v1499
      %v1532 = vmul.f32 %v1436, %v1500
      %v1533 = vmul.f32 %v1437, %v1501
      %v1534 = vmul.f32 %v1438, %v1502
      %v1535 = vpack.c.bf16 %v1188, %v1184
      %v1536 = vpack.c.bf16 %v1190, %v1186
      %v1537 = vpack.c.bf16 %v1196, %v1192
      %v1538 = vpack.c.bf16 %v1198, %v1194
      %v1539 = vpack.c.bf16 %v1204, %v1200
      %v1540 = vpack.c.bf16 %v1206, %v1202
      %v1541 = vpack.c.bf16 %v1212, %v1208
      %v1542 = vpack.c.bf16 %v1214, %v1210
      %v1543 = vpack.c.bf16 %v1220, %v1216
      %v1544 = vpack.c.bf16 %v1222, %v1218
      %v1545 = vpack.c.bf16 %v1228, %v1224
      %v1546 = vpack.c.bf16 %v1230, %v1226
      %v1547 = vpack.c.bf16 %v1236, %v1232
      %v1548 = vpack.c.bf16 %v1238, %v1234
      %v1549 = vpack.c.bf16 %v1244, %v1240
      %v1550 = vpack.c.bf16 %v1246, %v1242
      %v1551 = vpack.c.bf16 %v1252, %v1248
      %v1552 = vpack.c.bf16 %v1254, %v1250
      %v1553 = vpack.c.bf16 %v1260, %v1256
      %v1554 = vpack.c.bf16 %v1262, %v1258
      %v1555 = vpack.c.bf16 %v1268, %v1264
      %v1556 = vpack.c.bf16 %v1270, %v1266
      %v1557 = vpack.c.bf16 %v1276, %v1272
      %v1558 = vpack.c.bf16 %v1278, %v1274
      %v1559 = vpack.c.bf16 %v1284, %v1280
      %v1560 = vpack.c.bf16 %v1286, %v1282
      %v1561 = vpack.c.bf16 %v1292, %v1288
      %v1562 = vpack.c.bf16 %v1294, %v1290
      %v1563 = vpack.c.bf16 %v1300, %v1296
      %v1564 = vpack.c.bf16 %v1302, %v1298
      %v1565 = vpack.c.bf16 %v1308, %v1304
      %v1566 = vpack.c.bf16 %v1310, %v1306
      %1567 = vmatpush.bf16.msra.mxu0 %v836
      %1568 = vmatpush.bf16.msra.mxu0 %v835
      %1569 = vmatpush.bf16.msra.mxu0 %v834
      %1570 = vmatpush.bf16.msra.mxu0 %v833
      %1571 = vmatpush.bf16.msra.mxu0 %v832
      %1572 = vmatpush.bf16.msra.mxu0 %v831
      %1573 = vmatpush.bf16.msra.mxu0 %v830
      %1574 = vmatpush.bf16.msra.mxu0 %v829
      %1575 = vmatmul.bf16.gmra.mxu0 %v1535
      %v1576 = vpop.f32.mrf.mxu0
      %v1577 = vadd.f32 0.0, %v1576
      %v1578 = vpop.f32.mrf.mxu0
      %v1579 = vadd.f32 0.0, %v1578
      %1580 = vmatmul.bf16.gmra.mxu0 %v1537
      %v1581 = vpop.f32.mrf.mxu0
      %v1582 = vadd.f32 0.0, %v1581
      %v1583 = vpop.f32.mrf.mxu0
      %v1584 = vadd.f32 0.0, %v1583
      %1585 = vmatmul.bf16.gmra.mxu0 %v1539
      %v1586 = vpop.f32.mrf.mxu0
      %v1587 = vadd.f32 0.0, %v1586
      %v1588 = vpop.f32.mrf.mxu0
      %v1589 = vadd.f32 0.0, %v1588
      %1590 = vmatmul.bf16.gmra.mxu0 %v1541
      %v1591 = vpop.f32.mrf.mxu0
      %v1592 = vadd.f32 0.0, %v1591
      %v1593 = vpop.f32.mrf.mxu0
      %v1594 = vadd.f32 0.0, %v1593
      %1595 = vmatmul.bf16.gmra.mxu0 %v1543
      %v1596 = vpop.f32.mrf.mxu0
      %v1597 = vadd.f32 0.0, %v1596
      %v1598 = vpop.f32.mrf.mxu0
      %v1599 = vadd.f32 0.0, %v1598
      %1600 = vmatmul.bf16.gmra.mxu0 %v1545
      %v1601 = vpop.f32.mrf.mxu0
      %v1602 = vadd.f32 0.0, %v1601
      %v1603 = vpop.f32.mrf.mxu0
      %v1604 = vadd.f32 0.0, %v1603
      %1605 = vmatmul.bf16.gmra.mxu0 %v1547
      %v1606 = vpop.f32.mrf.mxu0
      %v1607 = vadd.f32 0.0, %v1606
      %v1608 = vpop.f32.mrf.mxu0
      %v1609 = vadd.f32 0.0, %v1608
      %1610 = vmatmul.bf16.gmra.mxu0 %v1549
      %v1611 = vpop.f32.mrf.mxu0
      %v1612 = vadd.f32 0.0, %v1611
      %v1613 = vpop.f32.mrf.mxu0
      %v1614 = vadd.f32 0.0, %v1613
      %1615 = vmatmul.bf16.gmra.mxu0 %v1551
      %v1616 = vpop.f32.mrf.mxu0
      %v1617 = vadd.f32 0.0, %v1616
      %v1618 = vpop.f32.mrf.mxu0
      %v1619 = vadd.f32 0.0, %v1618
      %1620 = vmatmul.bf16.gmra.mxu0 %v1553
      %v1621 = vpop.f32.mrf.mxu0
      %v1622 = vadd.f32 0.0, %v1621
      %v1623 = vpop.f32.mrf.mxu0
      %v1624 = vadd.f32 0.0, %v1623
      %1625 = vmatmul.bf16.gmra.mxu0 %v1555
      %v1626 = vpop.f32.mrf.mxu0
      %v1627 = vadd.f32 0.0, %v1626
      %v1628 = vpop.f32.mrf.mxu0
      %v1629 = vadd.f32 0.0, %v1628
      %1630 = vmatmul.bf16.gmra.mxu0 %v1557
      %v1631 = vpop.f32.mrf.mxu0
      %v1632 = vadd.f32 0.0, %v1631
      %v1633 = vpop.f32.mrf.mxu0
      %v1634 = vadd.f32 0.0, %v1633
      %1635 = vmatmul.bf16.gmra.mxu0 %v1559
      %v1636 = vpop.f32.mrf.mxu0
      %v1637 = vadd.f32 0.0, %v1636
      %v1638 = vpop.f32.mrf.mxu0
      %v1639 = vadd.f32 0.0, %v1638
      %1640 = vmatmul.bf16.gmra.mxu0 %v1561
      %v1641 = vpop.f32.mrf.mxu0
      %v1642 = vadd.f32 0.0, %v1641
      %v1643 = vpop.f32.mrf.mxu0
      %v1644 = vadd.f32 0.0, %v1643
      %1645 = vmatmul.bf16.gmra.mxu0 %v1563
      %v1646 = vpop.f32.mrf.mxu0
      %v1647 = vadd.f32 0.0, %v1646
      %v1648 = vpop.f32.mrf.mxu0
      %v1649 = vadd.f32 0.0, %v1648
      %1650 = vmatmul.bf16.gmra.mxu0 %v1565
      %v1651 = vpop.f32.mrf.mxu0
      %v1652 = vadd.f32 0.0, %v1651
      %v1653 = vpop.f32.mrf.mxu0
      %v1654 = vadd.f32 0.0, %v1653
      %1655 = vdwg.mxu0
      %1656 = vmatpush.bf16.msra.mxu0 %v844
      %1657 = vmatpush.bf16.msra.mxu0 %v843
      %1658 = vmatpush.bf16.msra.mxu0 %v842
      %1659 = vmatpush.bf16.msra.mxu0 %v841
      %1660 = vmatpush.bf16.msra.mxu0 %v840
      %1661 = vmatpush.bf16.msra.mxu0 %v839
      %1662 = vmatpush.bf16.msra.mxu0 %v838
      %1663 = vmatpush.bf16.msra.mxu0 %v837
      %1664 = vmatmul.bf16.gmra.mxu0 %v1536
      %v1665 = vpop.f32.mrf.mxu0
      %v1666 = vadd.f32 %v1577, %v1665
      %v1667 = vpop.f32.mrf.mxu0
      %v1668 = vadd.f32 %v1579, %v1667
      %1669 = vmatmul.bf16.gmra.mxu0 %v1538
      %v1670 = vpop.f32.mrf.mxu0
      %v1671 = vadd.f32 %v1582, %v1670
      %v1672 = vpop.f32.mrf.mxu0
      %v1673 = vadd.f32 %v1584, %v1672
      %1674 = vmatmul.bf16.gmra.mxu0 %v1540
      %v1675 = vpop.f32.mrf.mxu0
      %v1676 = vadd.f32 %v1587, %v1675
      %v1677 = vpop.f32.mrf.mxu0
      %v1678 = vadd.f32 %v1589, %v1677
      %1679 = vmatmul.bf16.gmra.mxu0 %v1542
      %v1680 = vpop.f32.mrf.mxu0
      %v1681 = vadd.f32 %v1592, %v1680
      %v1682 = vpop.f32.mrf.mxu0
      %v1683 = vadd.f32 %v1594, %v1682
      %1684 = vmatmul.bf16.gmra.mxu0 %v1544
      %v1685 = vpop.f32.mrf.mxu0
      %v1686 = vadd.f32 %v1597, %v1685
      %v1687 = vpop.f32.mrf.mxu0
      %v1688 = vadd.f32 %v1599, %v1687
      %1689 = vmatmul.bf16.gmra.mxu0 %v1546
      %v1690 = vpop.f32.mrf.mxu0
      %v1691 = vadd.f32 %v1602, %v1690
      %v1692 = vpop.f32.mrf.mxu0
      %v1693 = vadd.f32 %v1604, %v1692
      %1694 = vmatmul.bf16.gmra.mxu0 %v1548
      %v1695 = vpop.f32.mrf.mxu0
      %v1696 = vadd.f32 %v1607, %v1695
      %v1697 = vpop.f32.mrf.mxu0
      %v1698 = vadd.f32 %v1609, %v1697
      %1699 = vmatmul.bf16.gmra.mxu0 %v1550
      %v1700 = vpop.f32.mrf.mxu0
      %v1701 = vadd.f32 %v1612, %v1700
      %v1702 = vpop.f32.mrf.mxu0
      %v1703 = vadd.f32 %v1614, %v1702
      %1704 = vmatmul.bf16.gmra.mxu0 %v1552
      %v1705 = vpop.f32.mrf.mxu0
      %v1706 = vadd.f32 %v1617, %v1705
      %v1707 = vpop.f32.mrf.mxu0
      %v1708 = vadd.f32 %v1619, %v1707
      %1709 = vmatmul.bf16.gmra.mxu0 %v1554
      %v1710 = vpop.f32.mrf.mxu0
      %v1711 = vadd.f32 %v1622, %v1710
      %v1712 = vpop.f32.mrf.mxu0
      %v1713 = vadd.f32 %v1624, %v1712
      %1714 = vmatmul.bf16.gmra.mxu0 %v1556
      %v1715 = vpop.f32.mrf.mxu0
      %v1716 = vadd.f32 %v1627, %v1715
      %v1717 = vpop.f32.mrf.mxu0
      %v1718 = vadd.f32 %v1629, %v1717
      %1719 = vmatmul.bf16.gmra.mxu0 %v1558
      %v1720 = vpop.f32.mrf.mxu0
      %v1721 = vadd.f32 %v1632, %v1720
      %v1722 = vpop.f32.mrf.mxu0
      %v1723 = vadd.f32 %v1634, %v1722
      %1724 = vmatmul.bf16.gmra.mxu0 %v1560
      %v1725 = vpop.f32.mrf.mxu0
      %v1726 = vadd.f32 %v1637, %v1725
      %v1727 = vpop.f32.mrf.mxu0
      %v1728 = vadd.f32 %v1639, %v1727
      %1729 = vmatmul.bf16.gmra.mxu0 %v1562
      %v1730 = vpop.f32.mrf.mxu0
      %v1731 = vadd.f32 %v1642, %v1730
      %v1732 = vpop.f32.mrf.mxu0
      %v1733 = vadd.f32 %v1644, %v1732
      %1734 = vmatmul.bf16.gmra.mxu0 %v1564
      %v1735 = vpop.f32.mrf.mxu0
      %v1736 = vadd.f32 %v1647, %v1735
      %v1737 = vpop.f32.mrf.mxu0
      %v1738 = vadd.f32 %v1649, %v1737
      %1739 = vmatmul.bf16.gmra.mxu0 %v1566
      %v1740 = vpop.f32.mrf.mxu0
      %v1741 = vadd.f32 %v1652, %v1740
      %v1742 = vpop.f32.mrf.mxu0
      %v1743 = vadd.f32 %v1654, %v1742
      %1744 = vdwg.mxu0
      %v1745 = vmul.f32 %v1666, %v1503
      %v1746 = vmul.f32 %v1668, %v1504
      %v1747 = vmul.f32 %v1671, %v1505
      %v1748 = vmul.f32 %v1673, %v1506
      %v1749 = vmul.f32 %v1676, %v1507
      %v1750 = vmul.f32 %v1678, %v1508
      %v1751 = vmul.f32 %v1681, %v1509
      %v1752 = vmul.f32 %v1683, %v1510
      %v1753 = vmul.f32 %v1686, %v1511
      %v1754 = vmul.f32 %v1688, %v1512
      %v1755 = vmul.f32 %v1691, %v1513
      %v1756 = vmul.f32 %v1693, %v1514
      %v1757 = vmul.f32 %v1696, %v1515
      %v1758 = vmul.f32 %v1698, %v1516
      %v1759 = vmul.f32 %v1701, %v1517
      %v1760 = vmul.f32 %v1703, %v1518
      %v1761 = vmul.f32 %v1706, %v1519
      %v1762 = vmul.f32 %v1708, %v1520
      %v1763 = vmul.f32 %v1711, %v1521
      %v1764 = vmul.f32 %v1713, %v1522
      %v1765 = vmul.f32 %v1716, %v1523
      %v1766 = vmul.f32 %v1718, %v1524
      %v1767 = vmul.f32 %v1721, %v1525
      %v1768 = vmul.f32 %v1723, %v1526
      %v1769 = vmul.f32 %v1726, %v1527
      %v1770 = vmul.f32 %v1728, %v1528
      %v1771 = vmul.f32 %v1731, %v1529
      %v1772 = vmul.f32 %v1733, %v1530
      %v1773 = vmul.f32 %v1736, %v1531
      %v1774 = vmul.f32 %v1738, %v1532
      %v1775 = vmul.f32 %v1741, %v1533
      %v1776 = vmul.f32 %v1743, %v1534
      %vm1777 = vcmask 31744
      %1778 = vst.msk [vmem:[%s143] sm:$0xff] %vm1777, %v1745
      %1779 = vst.msk [vmem:[%s143 + $0x8] sm:$0xff] %vm1777, %v1746
      %1780 = vst.msk [vmem:[%s143 + $0x10] sm:$0xff] %vm1777, %v1747
      %1781 = vst.msk [vmem:[%s143 + $0x18] sm:$0xff] %vm1777, %v1748
      %1782 = vst.msk [vmem:[%s143 + $0x20] sm:$0xff] %vm1777, %v1749
      %1783 = vst.msk [vmem:[%s143 + $0x28] sm:$0xff] %vm1777, %v1750
      %1784 = vst.msk [vmem:[%s143 + $0x30] sm:$0xff] %vm1777, %v1751
      %1785 = vst.msk [vmem:[%s143 + $0x38] sm:$0xff] %vm1777, %v1752
      %1786 = vst.msk [vmem:[%s143 + $0x40] sm:$0xff] %vm1777, %v1753
      %1787 = vst.msk [vmem:[%s143 + $0x48] sm:$0xff] %vm1777, %v1754
      %1788 = vst.msk [vmem:[%s143 + $0x50] sm:$0xff] %vm1777, %v1755
      %1789 = vst.msk [vmem:[%s143 + $0x58] sm:$0xff] %vm1777, %v1756
      %1790 = vst.msk [vmem:[%s143 + $0x60] sm:$0xff] %vm1777, %v1757
      %1791 = vst.msk [vmem:[%s143 + $0x68] sm:$0xff] %vm1777, %v1758
      %1792 = vst.msk [vmem:[%s143 + $0x70] sm:$0xff] %vm1777, %v1759
      %1793 = vst.msk [vmem:[%s143 + $0x78] sm:$0xff] %vm1777, %v1760
      %1794 = vst.msk [vmem:[%s143 + $0x80] sm:$0xff] %vm1777, %v1761
      %1795 = vst.msk [vmem:[%s143 + $0x88] sm:$0xff] %vm1777, %v1762
      %1796 = vst.msk [vmem:[%s143 + $0x90] sm:$0xff] %vm1777, %v1763
      %1797 = vst.msk [vmem:[%s143 + $0x98] sm:$0xff] %vm1777, %v1764
      %1798 = vst.msk [vmem:[%s143 + $0xa0] sm:$0xff] %vm1777, %v1765
      %1799 = vst.msk [vmem:[%s143 + $0xa8] sm:$0xff] %vm1777, %v1766
      %1800 = vst.msk [vmem:[%s143 + $0xb0] sm:$0xff] %vm1777, %v1767
      %1801 = vst.msk [vmem:[%s143 + $0xb8] sm:$0xff] %vm1777, %v1768
      %1802 = vst.msk [vmem:[%s143 + $0xc0] sm:$0xff] %vm1777, %v1769
      %1803 = vst.msk [vmem:[%s143 + $0xc8] sm:$0xff] %vm1777, %v1770
      %1804 = vst.msk [vmem:[%s143 + $0xd0] sm:$0xff] %vm1777, %v1771
      %1805 = vst.msk [vmem:[%s143 + $0xd8] sm:$0xff] %vm1777, %v1772
      %1806 = vst.msk [vmem:[%s143 + $0xe0] sm:$0xff] %vm1777, %v1773
      %1807 = vst.msk [vmem:[%s143 + $0xe8] sm:$0xff] %vm1777, %v1774
      %1808 = vst.msk [vmem:[%s143 + $0xf0] sm:$0xff] %vm1777, %v1775
      %1809 = vst.msk [vmem:[%s143 + $0xf8] sm:$0xff] %vm1777, %v1776
      %p1810 = scmp.lt.s32.totalorder %s13, 1
      %s1811 = scalar_select %p1810, %s13, 1
      %s1812 = smul.addr %s1811, 32
      %s1813 = smul.addr %s1812, 8
      %s1814 = scalar_lea.vmem %s2, %s1813
      // Predicated region
      $region29: #{sdm_forward.1} parent=27 // pred_check
        %p1815 = pneg %p78
      $region30: #{sdm_forward.1} parent=27 // pred_check_branch
        %1817 = sbr.rel (%p1815) target = $region32
      $region31: #{sdm_forward.1} parent=27 // pred_region
        _
      $region32: #{sdm_forward.1} parent=27 // pred_fallthru
        _
    $region28: #{sdm_forward.1} parent=5 // pred_fallthru
      _
    %p1818 = scmp.le.s32.totalorder 2, %s8
    // Predicated region
    $region33: #{sdm_forward.1} parent=5 // pred_check
      %p1819 = pneg %p1818
    $region34: #{sdm_forward.1} parent=5 // pred_check_branch
      %1821 = sbr.rel (%p1819) target = $region36
    $region35: #{sdm_forward.1} parent=5 // pred_region
      %s1822 = ssub.s32 %s8, 2
      // Predicated region
      $region37: #{sdm_forward.1} parent=35 // pred_check
        %p1823 = pneg %p84
      $region38: #{sdm_forward.1} parent=35 // pred_check_branch
        %1825 = sbr.rel (%p1823) target = $region40
      $region39: #{sdm_forward.1} parent=35 // pred_region
        %p1826 = scmp.lt.s32.totalorder %s14, 1
        %s1827 = scalar_select %p1826, %s14, 1
        %s1828 = smul.addr %s1827, 32
        %s1829 = smul.addr %s1828, 8
        %s1830 = scalar_lea.vmem %s2, %s1829
      $region40: #{sdm_forward.1} parent=35 // pred_fallthru
        _
    $region36: #{sdm_forward.1} parent=5 // pred_fallthru
      _
  $region6: #{sdm_forward.1} parent=0 // loop_footer
    %s12 = sadd.s32 1, %s8
  $region7: #{sdm_forward.1} parent=0 // loop_footer_branch
    %7 = sbr.rel target = $region3
  $region8: #{sdm_forward.1} parent=0 // loop_exit
    _

</llo_original>
